<compile_context>
chip_gen: v5e
topology: v5e:2x2
jax: 0.10.0
libtpu: 0.0.40
codegen_flags: <defaults>
</compile_context>

<pallas_src>
import numpy as np
import jax
import jax.numpy as jnp
from jax.experimental import pallas as pl
from jax.experimental.pallas import tpu as pltpu


# ----------------------------------------------------------------------------
# Pallas kernel: whole bidirectional LSTM in one grid step
# ----------------------------------------------------------------------------
def bilstm_kernel(lens_ref, x_ref, wf_ref, bf_ref, wb_ref, bb_ref,
                  out_ref, of_s, ob_s):
    T, Bp, E = x_ref.shape
    H = E

    # Hoisted loads: once per kernel call, not once per timestep.
    lens = lens_ref[...]          # (Bp, 1) int32, lengths incl. sos/eos (0 = pad row)
    wf = wf_ref[...]              # (E+H, 4H)  fused [W_ih; W_hh], forward
    bf = bf_ref[...]              # (1, 4H)    b_ih + b_hh, forward
    wb = wb_ref[...]
    bb = bb_ref[...]

    # Lane mask selecting the cell-candidate ('g') gate columns [2H, 3H):
    # full-width tanh/sigmoid + select instead of per-gate narrow slicing
    # before the nonlinearities. Computed once (EUP has slack; lane selects don't).
    col = jax.lax.broadcasted_iota(jnp.int32, (Bp, 4 * H), 1)
    g_cols = (col >= 2 * H) & (col < 3 * H)

    def cell(x, h, c, w, b):
        # single fused MXU matmul per direction per step
        xh = jnp.concatenate([x, h], axis=-1)                         # (Bp, E+H)
        gates = jnp.dot(xh, w, preferred_element_type=jnp.float32) + b  # (Bp, 4H)
        act = jnp.where(g_cols, jnp.tanh(gates), jax.nn.sigmoid(gates))
        i = act[:, 0 * H:1 * H]
        f = act[:, 1 * H:2 * H]
        g = act[:, 2 * H:3 * H]
        o = act[:, 3 * H:4 * H]
        c_new = f * c + i * g
        h_new = o * jnp.tanh(c_new)
        return h_new, c_new

    zero = jnp.zeros((Bp, H), jnp.float32)

    def body(t, carry):
        h_f, c_f, h_b, c_b = carry

        # ---- forward direction, time t ----
        h_f, c_f = cell(x_ref[t], h_f, c_f, wf, bf)
        of_s[t] = jnp.where(t < lens, h_f, 0.0)

        # ---- backward direction, time T-1-t ----
        tb = T - 1 - t
        hb_new, cb_new = cell(x_ref[tb], h_b, c_b, wb, bb)
        mask_b = tb < lens
        # state stays at initial zeros until tb reaches the last valid token
        h_b = jnp.where(mask_b, hb_new, h_b)
        c_b = jnp.where(mask_b, cb_new, c_b)
        ob_s[tb] = jnp.where(mask_b, hb_new, 0.0)

        return (h_f, c_f, h_b, c_b)

    # short static trip count -> fully unrolled for LLO scheduling visibility
    jax.lax.fori_loop(0, T, body, (zero, zero, zero, zero), unroll=True)

    # Fused concat: single 2H-wide output slab, written back to HBM once.
    out_ref[:, :, 0:H] = of_s[...]
    out_ref[:, :, H:2 * H] = ob_s[...]


def bilstm_encode(emb_btE, lens_total, params):
    """emb_btE: (B, T, E) float32 embeddings; lens_total: (B,) int32 (= len + 2)."""
    emb_btE = jnp.asarray(emb_btE, jnp.float32)
    B, T, E = emb_btE.shape
    H = E

    # Pad batch to a sublane multiple (padded rows: zero embeddings, len = 0
    # -> their outputs are exactly zero and are sliced off below).
    Bp = max(8, -(-B // 8) * 8)
    emb_p = jnp.zeros((Bp, T, E), jnp.float32).at[:B].set(emb_btE)
    lens_p = jnp.zeros((Bp, 1), jnp.int32).at[:B, 0].set(lens_total.astype(jnp.int32))
    x_tbE = jnp.transpose(emb_p, (1, 0, 2))                 # time-major (T, Bp, E)

    out_tb = pl.pallas_call(
        bilstm_kernel,
        out_shape=jax.ShapeDtypeStruct((T, Bp, 2 * H), jnp.float32),
        grid=(1,),
        in_specs=[
            pl.BlockSpec((Bp, 1), lambda i: (0, 0)),          # lens
            pl.BlockSpec((T, Bp, E), lambda i: (0, 0, 0)),    # x (shared fwd/bwd)
            pl.BlockSpec((E + H, 4 * H), lambda i: (0, 0)),   # fused W fwd
            pl.BlockSpec((1, 4 * H), lambda i: (0, 0)),       # bias fwd
            pl.BlockSpec((E + H, 4 * H), lambda i: (0, 0)),   # fused W bwd
            pl.BlockSpec((1, 4 * H), lambda i: (0, 0)),       # bias bwd
        ],
        out_specs=pl.BlockSpec((T, Bp, 2 * H), lambda i: (0, 0, 0)),
        scratch_shapes=[pltpu.VMEM((T, Bp, H), jnp.float32),  # fwd outputs
                        pltpu.VMEM((T, Bp, H), jnp.float32)], # bwd outputs
        compiler_params=pltpu.CompilerParams(
            dimension_semantics=("arbitrary",)),               # sequential recurrence
    )(lens_p, x_tbE, params["wf"], params["bf"], params["wb"], params["bb"])

    # (T, Bp, 2H) -> batch-first (B, T, 2H), drop batch padding
    return jnp.transpose(out_tb, (1, 0, 2))[:B]


# ----------------------------------------------------------------------------
# Pure-JAX reference (packed bidirectional LSTM semantics) for verification
# ----------------------------------------------------------------------------
def ref_bilstm(emb_btE, lens_total, params):
    B, T, E = emb_btE.shape
    H = E

    def cell(x, h, c, w, b):
        gates = jnp.concatenate([x, h], axis=-1) @ w + b
        i = jax.nn.sigmoid(gates[:, :H])
        f = jax.nn.sigmoid(gates[:, H:2 * H])
        g = jnp.tanh(gates[:, 2 * H:3 * H])
        o = jax.nn.sigmoid(gates[:, 3 * H:])
        c = f * c + i * g
        return o * jnp.tanh(c), c

    lens = lens_total[:, None]
    h = jnp.zeros((B, H)); c = jnp.zeros((B, H)); outs_f = []
    for t in range(T):
        h, c = cell(emb_btE[:, t], h, c, params["wf"], params["bf"])
        outs_f.append(jnp.where(t < lens, h, 0.0))
    h = jnp.zeros((B, H)); c = jnp.zeros((B, H)); outs_b = [None] * T
    for t in reversed(range(T)):
        hn, cn = cell(emb_btE[:, t], h, c, params["wb"], params["bb"])
        m = t < lens
        h = jnp.where(m, hn, h); c = jnp.where(m, cn, c)
        outs_b[t] = jnp.where(m, hn, 0.0)
    return jnp.concatenate([jnp.stack(outs_f, 1), jnp.stack(outs_b, 1)], axis=-1)


# ----------------------------------------------------------------------------
# Encoder glue: tokenization, embedding table, parameter init
# ----------------------------------------------------------------------------
class EncoderPallas:
    def __init__(self, embedding_data, vocab, key):
        num_embedding, emb_dim = embedding_data.shape
        self.unk_idx = num_embedding
        self.sos_idx = num_embedding + 1
        self.eos_idx = num_embedding + 2
        self.pad_idx = num_embedding + 3
        self.vocab = vocab
        self.emb_dim = emb_dim

        k = jax.random.split(key, 9)
        special = jax.random.normal(k[0], (3, emb_dim), jnp.float32) * 0.01
        pad_row = jnp.zeros((1, emb_dim), jnp.float32)
        self.embedding = jnp.concatenate(
            [jnp.asarray(embedding_data, jnp.float32), special, pad_row], axis=0)

        H = emb_dim
        s = 1.0 / np.sqrt(H)
        u = lambda kk, shape: jax.random.uniform(kk, shape, jnp.float32, -s, s)
        # PyTorch nn.LSTM weights are (4H, E)/(4H, H) with two biases.
        # Stored transposed and fused for a single matmul per cell:
        #   W = [W_ih; W_hh]  (E+H, 4H),   b = b_ih + b_hh   (1, 4H)
        wih_f, whh_f = u(k[1], (emb_dim, 4 * H)), u(k[2], (H, 4 * H))
        wih_b, whh_b = u(k[5], (emb_dim, 4 * H)), u(k[6], (H, 4 * H))
        self.params = {
            "wf": jnp.concatenate([wih_f, whh_f], axis=0),
            "bf": u(k[3], (1, 4 * H)) + u(k[4], (1, 4 * H)),
            "wb": jnp.concatenate([wih_b, whh_b], axis=0),
            "bb": u(k[7], (1, 4 * H)) + u(k[8], (1, 4 * H)),
        }

    def tokenize(self, sentences):
        tokens_list = [[self.vocab.get(w, self.unk_idx) for w in s] for s in sentences]
        lens = list(map(len, tokens_list))
        max_len = max(lens)
        tokens = np.full((len(sentences), max_len + 2), self.pad_idx, dtype=np.int32)
        for i, ts in enumerate(tokens_list):
            tokens[i, 0] = self.sos_idx
            tokens[i, 1:len(ts) + 1] = ts
            tokens[i, len(ts) + 1] = self.eos_idx
        return jnp.asarray(tokens), jnp.asarray(np.array(lens, np.int32) + 2)

    def forward(self, sentences):
        tokens, lens_total = self.tokenize(sentences)
        emb = jnp.take(self.embedding, tokens, axis=0)        # (B, T, E) glue
        return bilstm_encode(emb, lens_total, self.params)    # Pallas hot path


# ----------------------------------------------------------------------------
if __name__ == "__main__":
    key = jax.random.PRNGKey(0)
    k_emb, k_enc = jax.random.split(key)

    num_vocab, emb_dim = 10, 32
    embedding_data = jax.random.normal(k_emb, (num_vocab, emb_dim), jnp.float32)
    words = [f"w{i}" for i in range(num_vocab)]
    vocab = {w: i for i, w in enumerate(words)}

    enc = EncoderPallas(np.asarray(embedding_data), vocab, k_enc)

    # batch of 2 tokenized sentences, variable length (5 and 3) -> T = 5 + 2 = 7
    sentences = [["w0", "w3", "w5", "unknown_word", "w9"],
                 ["w2", "w7", "w1"]]

    out = enc.forward(sentences)
    out = jax.block_until_ready(out)

    # verify against pure-JAX packed-BiLSTM reference
    tokens, lens_total = enc.tokenize(sentences)
    emb = jnp.take(enc.embedding, tokens, axis=0)
    ref = jax.block_until_ready(ref_bilstm(emb, lens_total, enc.params))

    assert out.shape == (2, 7, 2 * emb_dim), out.shape
    np.testing.assert_allclose(np.asarray(out), np.asarray(ref), rtol=1e-4, atol=2e-5)

    print("KERNEL_OK")
</pallas_src>

<mosaic_0001>
module attributes {stable_mosaic.version = 11 : i64} {
  func.func @bilstm_kernel(%arg0: i32, %arg1: memref<8x1xi32, #tpu.memory_space<vmem>>, %arg2: memref<7x8x32xf32, #tpu.memory_space<vmem>>, %arg3: memref<64x128xf32, #tpu.memory_space<vmem>>, %arg4: memref<1x128xf32, #tpu.memory_space<vmem>>, %arg5: memref<64x128xf32, #tpu.memory_space<vmem>>, %arg6: memref<1x128xf32, #tpu.memory_space<vmem>>, %arg7: memref<7x8x64xf32, #tpu.memory_space<vmem>>, %arg8: memref<7x8x32xf32, #tpu.memory_space<vmem>>, %arg9: memref<7x8x32xf32, #tpu.memory_space<vmem>>) attributes {dimension_semantics = [#tpu.dimension_semantics<arbitrary>], iteration_bounds = array<i64: 1>, scalar_prefetch = 0 : i64, scratch_operands = 2 : i64, tpu.core_type = #tpu.core_type<tc>, window_params = [{pipeline_mode = #tpu.pipeline_mode<synchronous>, transform_indices = @transform_0, window_bounds = array<i64: 8, 1>}, {pipeline_mode = #tpu.pipeline_mode<synchronous>, transform_indices = @transform_1, window_bounds = array<i64: 7, 8, 32>}, {pipeline_mode = #tpu.pipeline_mode<synchronous>, transform_indices = @transform_2, window_bounds = array<i64: 64, 128>}, {pipeline_mode = #tpu.pipeline_mode<synchronous>, transform_indices = @transform_3, window_bounds = array<i64: 1, 128>}, {pipeline_mode = #tpu.pipeline_mode<synchronous>, transform_indices = @transform_4, window_bounds = array<i64: 64, 128>}, {pipeline_mode = #tpu.pipeline_mode<synchronous>, transform_indices = @transform_5, window_bounds = array<i64: 1, 128>}, {pipeline_mode = #tpu.pipeline_mode<synchronous>, transform_indices = @transform_6, window_bounds = array<i64: 7, 8, 64>}]} {
    %c0 = arith.constant 0 : index
    %c0_0 = arith.constant 0 : index
    %0 = vector.load %arg1[%c0, %c0_0] : memref<8x1xi32, #tpu.memory_space<vmem>>, vector<8x1xi32>
    %c0_1 = arith.constant 0 : index
    %c0_2 = arith.constant 0 : index
    %1 = vector.load %arg3[%c0_1, %c0_2] : memref<64x128xf32, #tpu.memory_space<vmem>>, vector<64x128xf32>
    %c0_3 = arith.constant 0 : index
    %c0_4 = arith.constant 0 : index
    %2 = vector.load %arg4[%c0_3, %c0_4] : memref<1x128xf32, #tpu.memory_space<vmem>>, vector<1x128xf32>
    %c0_5 = arith.constant 0 : index
    %c0_6 = arith.constant 0 : index
    %3 = vector.load %arg5[%c0_5, %c0_6] : memref<64x128xf32, #tpu.memory_space<vmem>>, vector<64x128xf32>
    %c0_7 = arith.constant 0 : index
    %c0_8 = arith.constant 0 : index
    %4 = vector.load %arg6[%c0_7, %c0_8] : memref<1x128xf32, #tpu.memory_space<vmem>>, vector<1x128xf32>
    %5 = tpu.iota {dimensions = array<i32: 1>} : vector<8x128xi32>
    %c64_i32 = arith.constant 64 : i32
    %6 = vector.broadcast %c64_i32 : i32 to vector<8x128xi32>
    %7 = arith.cmpi sge, %5, %6 : vector<8x128xi32>
    %c96_i32 = arith.constant 96 : i32
    %8 = vector.broadcast %c96_i32 : i32 to vector<8x128xi32>
    %9 = arith.cmpi slt, %5, %8 : vector<8x128xi32>
    %10 = arith.andi %7, %9 : vector<8x128xi1>
    %cst = arith.constant 0.000000e+00 : f32
    %11 = vector.broadcast %cst : f32 to vector<8x32xf32>
    %c0_i32 = arith.constant 0 : i32
    %12 = arith.index_cast %c0_i32 : i32 to index
    %c0_9 = arith.constant 0 : index
    %c0_10 = arith.constant 0 : index
    %13 = vector.load %arg2[%12, %c0_9, %c0_10] : memref<7x8x32xf32, #tpu.memory_space<vmem>>, vector<1x8x32xf32>
    %14 = vector.shape_cast %13 : vector<1x8x32xf32> to vector<8x32xf32>
    %15 = tpu.concatenate %14, %11 in 1 : vector<8x32xf32>, vector<8x32xf32> -> vector<8x64xf32>
    %cst_11 = arith.constant dense<0.000000e+00> : vector<8x128xf32>
    %16 = tpu.matmul %15, %1, %cst_11 {dimension_numbers = #tpu.dot_dimension_numbers<[1], [0], [0], [1], [0, 0, 1, 1], [], []>} : vector<8x64xf32>, vector<64x128xf32>, vector<8x128xf32> -> vector<8x128xf32>
    %17 = vector.broadcast %2 : vector<1x128xf32> to vector<8x128xf32>
    %18 = arith.addf %16, %17 : vector<8x128xf32>
    %19 = math.tanh %18 : vector<8x128xf32>
    %20 = arith.negf %18 : vector<8x128xf32>
    %21 = math.exp %20 : vector<8x128xf32>
    %cst_12 = arith.constant 1.000000e+00 : f32
    %22 = vector.broadcast %cst_12 : f32 to vector<8x128xf32>
    %23 = arith.addf %22, %21 : vector<8x128xf32>
    %24 = arith.divf %22, %23 : vector<8x128xf32>
    %25 = arith.select %10, %19, %24 : vector<8x128xi1>, vector<8x128xf32>
    %26 = vector.extract_strided_slice %25 {offsets = [0, 0], sizes = [8, 32], strides = [1, 1]} : vector<8x128xf32> to vector<8x32xf32>
    %27 = vector.extract_strided_slice %25 {offsets = [0, 32], sizes = [8, 32], strides = [1, 1]} : vector<8x128xf32> to vector<8x32xf32>
    %28 = vector.extract_strided_slice %25 {offsets = [0, 64], sizes = [8, 32], strides = [1, 1]} : vector<8x128xf32> to vector<8x32xf32>
    %29 = vector.extract_strided_slice %25 {offsets = [0, 96], sizes = [8, 32], strides = [1, 1]} : vector<8x128xf32> to vector<8x32xf32>
    %30 = arith.mulf %27, %11 : vector<8x32xf32>
    %31 = arith.mulf %26, %28 : vector<8x32xf32>
    %32 = arith.addf %30, %31 : vector<8x32xf32>
    %33 = math.tanh %32 : vector<8x32xf32>
    %34 = arith.mulf %29, %33 : vector<8x32xf32>
    %35 = vector.broadcast %c0_i32 : i32 to vector<8x1xi32>
    %36 = arith.cmpi slt, %35, %0 : vector<8x1xi32>
    %cst_13 = arith.constant 0.000000e+00 : f32
    %37 = vector.shape_cast %36 : vector<8x1xi1> to vector<8x1xi1>
    %38 = vector.broadcast %37 : vector<8x1xi1> to vector<8x32xi1>
    %39 = vector.broadcast %cst_13 : f32 to vector<8x32xf32>
    %40 = arith.select %38, %34, %39 : vector<8x32xi1>, vector<8x32xf32>
    %41 = arith.index_cast %c0_i32 : i32 to index
    %c0_14 = arith.constant 0 : index
    %c0_15 = arith.constant 0 : index
    %42 = vector.load %arg8[%41, %c0_14, %c0_15] : memref<7x8x32xf32, #tpu.memory_space<vmem>>, vector<1x8x32xf32>
    %43 = vector.shape_cast %42 : vector<1x8x32xf32> to vector<8x32xf32>
    %44 = vector.shape_cast %40 : vector<8x32xf32> to vector<1x8x32xf32>
    tpu.vector_store %arg8[%41, %c0_14, %c0_15], %44 {strides = array<i32>} : memref<7x8x32xf32, #tpu.memory_space<vmem>>, vector<1x8x32xf32>,
    %c6_i32 = arith.constant 6 : i32
    %45 = arith.subi %c6_i32, %c0_i32 : i32
    %46 = arith.index_cast %45 : i32 to index
    %c0_16 = arith.constant 0 : index
    %c0_17 = arith.constant 0 : index
    %47 = vector.load %arg2[%46, %c0_16, %c0_17] : memref<7x8x32xf32, #tpu.memory_space<vmem>>, vector<1x8x32xf32>
    %48 = vector.shape_cast %47 : vector<1x8x32xf32> to vector<8x32xf32>
    %49 = tpu.concatenate %48, %11 in 1 : vector<8x32xf32>, vector<8x32xf32> -> vector<8x64xf32>
    %cst_18 = arith.constant dense<0.000000e+00> : vector<8x128xf32>
    %50 = tpu.matmul %49, %3, %cst_18 {dimension_numbers = #tpu.dot_dimension_numbers<[1], [0], [0], [1], [0, 0, 1, 1], [], []>} : vector<8x64xf32>, vector<64x128xf32>, vector<8x128xf32> -> vector<8x128xf32>
    %51 = vector.broadcast %4 : vector<1x128xf32> to vector<8x128xf32>
    %52 = arith.addf %50, %51 : vector<8x128xf32>
    %53 = math.tanh %52 : vector<8x128xf32>
    %54 = arith.negf %52 : vector<8x128xf32>
    %55 = math.exp %54 : vector<8x128xf32>
    %cst_19 = arith.constant 1.000000e+00 : f32
    %56 = vector.broadcast %cst_19 : f32 to vector<8x128xf32>
    %57 = arith.addf %56, %55 : vector<8x128xf32>
    %58 = arith.divf %56, %57 : vector<8x128xf32>
    %59 = arith.select %10, %53, %58 : vector<8x128xi1>, vector<8x128xf32>
    %60 = vector.extract_strided_slice %59 {offsets = [0, 0], sizes = [8, 32], strides = [1, 1]} : vector<8x128xf32> to vector<8x32xf32>
    %61 = vector.extract_strided_slice %59 {offsets = [0, 32], sizes = [8, 32], strides = [1, 1]} : vector<8x128xf32> to vector<8x32xf32>
    %62 = vector.extract_strided_slice %59 {offsets = [0, 64], sizes = [8, 32], strides = [1, 1]} : vector<8x128xf32> to vector<8x32xf32>
    %63 = vector.extract_strided_slice %59 {offsets = [0, 96], sizes = [8, 32], strides = [1, 1]} : vector<8x128xf32> to vector<8x32xf32>
    %64 = arith.mulf %61, %11 : vector<8x32xf32>
    %65 = arith.mulf %60, %62 : vector<8x32xf32>
    %66 = arith.addf %64, %65 : vector<8x32xf32>
    %67 = math.tanh %66 : vector<8x32xf32>
    %68 = arith.mulf %63, %67 : vector<8x32xf32>
    %69 = vector.broadcast %45 : i32 to vector<8x1xi32>
    %70 = arith.cmpi slt, %69, %0 : vector<8x1xi32>
    %71 = vector.shape_cast %70 : vector<8x1xi1> to vector<8x1xi1>
    %72 = vector.broadcast %71 : vector<8x1xi1> to vector<8x32xi1>
    %73 = arith.select %72, %68, %11 : vector<8x32xi1>, vector<8x32xf32>
    %74 = vector.shape_cast %70 : vector<8x1xi1> to vector<8x1xi1>
    %75 = vector.broadcast %74 : vector<8x1xi1> to vector<8x32xi1>
    %76 = arith.select %75, %66, %11 : vector<8x32xi1>, vector<8x32xf32>
    %cst_20 = arith.constant 0.000000e+00 : f32
    %77 = vector.shape_cast %70 : vector<8x1xi1> to vector<8x1xi1>
    %78 = vector.broadcast %77 : vector<8x1xi1> to vector<8x32xi1>
    %79 = vector.broadcast %cst_20 : f32 to vector<8x32xf32>
    %80 = arith.select %78, %68, %79 : vector<8x32xi1>, vector<8x32xf32>
    %81 = arith.index_cast %45 : i32 to index
    %c0_21 = arith.constant 0 : index
    %c0_22 = arith.constant 0 : index
    %82 = vector.load %arg9[%81, %c0_21, %c0_22] : memref<7x8x32xf32, #tpu.memory_space<vmem>>, vector<1x8x32xf32>
    %83 = vector.shape_cast %82 : vector<1x8x32xf32> to vector<8x32xf32>
    %84 = vector.shape_cast %80 : vector<8x32xf32> to vector<1x8x32xf32>
    tpu.vector_store %arg9[%81, %c0_21, %c0_22], %84 {strides = array<i32>} : memref<7x8x32xf32, #tpu.memory_space<vmem>>, vector<1x8x32xf32>,
    %c1_i32 = arith.constant 1 : i32
    %85 = arith.index_cast %c1_i32 : i32 to index
    %c0_23 = arith.constant 0 : index
    %c0_24 = arith.constant 0 : index
    %86 = vector.load %arg2[%85, %c0_23, %c0_24] : memref<7x8x32xf32, #tpu.memory_space<vmem>>, vector<1x8x32xf32>
    %87 = vector.shape_cast %86 : vector<1x8x32xf32> to vector<8x32xf32>
    %88 = tpu.concatenate %87, %34 in 1 : vector<8x32xf32>, vector<8x32xf32> -> vector<8x64xf32>
    %cst_25 = arith.constant dense<0.000000e+00> : vector<8x128xf32>
    %89 = tpu.matmul %88, %1, %cst_25 {dimension_numbers = #tpu.dot_dimension_numbers<[1], [0], [0], [1], [0, 0, 1, 1], [], []>} : vector<8x64xf32>, vector<64x128xf32>, vector<8x128xf32> -> vector<8x128xf32>
    %90 = vector.broadcast %2 : vector<1x128xf32> to vector<8x128xf32>
    %91 = arith.addf %89, %90 : vector<8x128xf32>
    %92 = math.tanh %91 : vector<8x128xf32>
    %93 = arith.negf %91 : vector<8x128xf32>
    %94 = math.exp %93 : vector<8x128xf32>
    %cst_26 = arith.constant 1.000000e+00 : f32
    %95 = vector.broadcast %cst_26 : f32 to vector<8x128xf32>
    %96 = arith.addf %95, %94 : vector<8x128xf32>
    %97 = arith.divf %95, %96 : vector<8x128xf32>
    %98 = arith.select %10, %92, %97 : vector<8x128xi1>, vector<8x128xf32>
    %99 = vector.extract_strided_slice %98 {offsets = [0, 0], sizes = [8, 32], strides = [1, 1]} : vector<8x128xf32> to vector<8x32xf32>
    %100 = vector.extract_strided_slice %98 {offsets = [0, 32], sizes = [8, 32], strides = [1, 1]} : vector<8x128xf32> to vector<8x32xf32>
    %101 = vector.extract_strided_slice %98 {offsets = [0, 64], sizes = [8, 32], strides = [1, 1]} : vector<8x128xf32> to vector<8x32xf32>
    %102 = vector.extract_strided_slice %98 {offsets = [0, 96], sizes = [8, 32], strides = [1, 1]} : vector<8x128xf32> to vector<8x32xf32>
    %103 = arith.mulf %100, %32 : vector<8x32xf32>
    %104 = arith.mulf %99, %101 : vector<8x32xf32>
    %105 = arith.addf %103, %104 : vector<8x32xf32>
    %106 = math.tanh %105 : vector<8x32xf32>
    %107 = arith.mulf %102, %106 : vector<8x32xf32>
    %108 = vector.broadcast %c1_i32 : i32 to vector<8x1xi32>
    %109 = arith.cmpi slt, %108, %0 : vector<8x1xi32>
    %cst_27 = arith.constant 0.000000e+00 : f32
    %110 = vector.shape_cast %109 : vector<8x1xi1> to vector<8x1xi1>
    %111 = vector.broadcast %110 : vector<8x1xi1> to vector<8x32xi1>
    %112 = vector.broadcast %cst_27 : f32 to vector<8x32xf32>
    %113 = arith.select %111, %107, %112 : vector<8x32xi1>, vector<8x32xf32>
    %114 = arith.index_cast %c1_i32 : i32 to index
    %c0_28 = arith.constant 0 : index
    %c0_29 = arith.constant 0 : index
    %115 = vector.load %arg8[%114, %c0_28, %c0_29] : memref<7x8x32xf32, #tpu.memory_space<vmem>>, vector<1x8x32xf32>
    %116 = vector.shape_cast %115 : vector<1x8x32xf32> to vector<8x32xf32>
    %117 = vector.shape_cast %113 : vector<8x32xf32> to vector<1x8x32xf32>
    tpu.vector_store %arg8[%114, %c0_28, %c0_29], %117 {strides = array<i32>} : memref<7x8x32xf32, #tpu.memory_space<vmem>>, vector<1x8x32xf32>,
    %c6_i32_30 = arith.constant 6 : i32
    %118 = arith.subi %c6_i32_30, %c1_i32 : i32
    %119 = arith.index_cast %118 : i32 to index
    %c0_31 = arith.constant 0 : index
    %c0_32 = arith.constant 0 : index
    %120 = vector.load %arg2[%119, %c0_31, %c0_32] : memref<7x8x32xf32, #tpu.memory_space<vmem>>, vector<1x8x32xf32>
    %121 = vector.shape_cast %120 : vector<1x8x32xf32> to vector<8x32xf32>
    %122 = tpu.concatenate %121, %73 in 1 : vector<8x32xf32>, vector<8x32xf32> -> vector<8x64xf32>
    %cst_33 = arith.constant dense<0.000000e+00> : vector<8x128xf32>
    %123 = tpu.matmul %122, %3, %cst_33 {dimension_numbers = #tpu.dot_dimension_numbers<[1], [0], [0], [1], [0, 0, 1, 1], [], []>} : vector<8x64xf32>, vector<64x128xf32>, vector<8x128xf32> -> vector<8x128xf32>
    %124 = vector.broadcast %4 : vector<1x128xf32> to vector<8x128xf32>
    %125 = arith.addf %123, %124 : vector<8x128xf32>
    %126 = math.tanh %125 : vector<8x128xf32>
    %127 = arith.negf %125 : vector<8x128xf32>
    %128 = math.exp %127 : vector<8x128xf32>
    %cst_34 = arith.constant 1.000000e+00 : f32
    %129 = vector.broadcast %cst_34 : f32 to vector<8x128xf32>
    %130 = arith.addf %129, %128 : vector<8x128xf32>
    %131 = arith.divf %129, %130 : vector<8x128xf32>
    %132 = arith.select %10, %126, %131 : vector<8x128xi1>, vector<8x128xf32>
    %133 = vector.extract_strided_slice %132 {offsets = [0, 0], sizes = [8, 32], strides = [1, 1]} : vector<8x128xf32> to vector<8x32xf32>
    %134 = vector.extract_strided_slice %132 {offsets = [0, 32], sizes = [8, 32], strides = [1, 1]} : vector<8x128xf32> to vector<8x32xf32>
    %135 = vector.extract_strided_slice %132 {offsets = [0, 64], sizes = [8, 32], strides = [1, 1]} : vector<8x128xf32> to vector<8x32xf32>
    %136 = vector.extract_strided_slice %132 {offsets = [0, 96], sizes = [8, 32], strides = [1, 1]} : vector<8x128xf32> to vector<8x32xf32>
    %137 = arith.mulf %134, %76 : vector<8x32xf32>
    %138 = arith.mulf %133, %135 : vector<8x32xf32>
    %139 = arith.addf %137, %138 : vector<8x32xf32>
    %140 = math.tanh %139 : vector<8x32xf32>
    %141 = arith.mulf %136, %140 : vector<8x32xf32>
    %142 = vector.broadcast %118 : i32 to vector<8x1xi32>
    %143 = arith.cmpi slt, %142, %0 : vector<8x1xi32>
    %144 = vector.shape_cast %143 : vector<8x1xi1> to vector<8x1xi1>
    %145 = vector.broadcast %144 : vector<8x1xi1> to vector<8x32xi1>
    %146 = arith.select %145, %141, %73 : vector<8x32xi1>, vector<8x32xf32>
    %147 = vector.shape_cast %143 : vector<8x1xi1> to vector<8x1xi1>
    %148 = vector.broadcast %147 : vector<8x1xi1> to vector<8x32xi1>
    %149 = arith.select %148, %139, %76 : vector<8x32xi1>, vector<8x32xf32>
    %cst_35 = arith.constant 0.000000e+00 : f32
    %150 = vector.shape_cast %143 : vector<8x1xi1> to vector<8x1xi1>
    %151 = vector.broadcast %150 : vector<8x1xi1> to vector<8x32xi1>
    %152 = vector.broadcast %cst_35 : f32 to vector<8x32xf32>
    %153 = arith.select %151, %141, %152 : vector<8x32xi1>, vector<8x32xf32>
    %154 = arith.index_cast %118 : i32 to index
    %c0_36 = arith.constant 0 : index
    %c0_37 = arith.constant 0 : index
    %155 = vector.load %arg9[%154, %c0_36, %c0_37] : memref<7x8x32xf32, #tpu.memory_space<vmem>>, vector<1x8x32xf32>
    %156 = vector.shape_cast %155 : vector<1x8x32xf32> to vector<8x32xf32>
    %157 = vector.shape_cast %153 : vector<8x32xf32> to vector<1x8x32xf32>
    tpu.vector_store %arg9[%154, %c0_36, %c0_37], %157 {strides = array<i32>} : memref<7x8x32xf32, #tpu.memory_space<vmem>>, vector<1x8x32xf32>,
    %c2_i32 = arith.constant 2 : i32
    %158 = arith.index_cast %c2_i32 : i32 to index
    %c0_38 = arith.constant 0 : index
    %c0_39 = arith.constant 0 : index
    %159 = vector.load %arg2[%158, %c0_38, %c0_39] : memref<7x8x32xf32, #tpu.memory_space<vmem>>, vector<1x8x32xf32>
    %160 = vector.shape_cast %159 : vector<1x8x32xf32> to vector<8x32xf32>
    %161 = tpu.concatenate %160, %107 in 1 : vector<8x32xf32>, vector<8x32xf32> -> vector<8x64xf32>
    %cst_40 = arith.constant dense<0.000000e+00> : vector<8x128xf32>
    %162 = tpu.matmul %161, %1, %cst_40 {dimension_numbers = #tpu.dot_dimension_numbers<[1], [0], [0], [1], [0, 0, 1, 1], [], []>} : vector<8x64xf32>, vector<64x128xf32>, vector<8x128xf32> -> vector<8x128xf32>
    %163 = vector.broadcast %2 : vector<1x128xf32> to vector<8x128xf32>
    %164 = arith.addf %162, %163 : vector<8x128xf32>
    %165 = math.tanh %164 : vector<8x128xf32>
    %166 = arith.negf %164 : vector<8x128xf32>
    %167 = math.exp %166 : vector<8x128xf32>
    %cst_41 = arith.constant 1.000000e+00 : f32
    %168 = vector.broadcast %cst_41 : f32 to vector<8x128xf32>
    %169 = arith.addf %168, %167 : vector<8x128xf32>
    %170 = arith.divf %168, %169 : vector<8x128xf32>
    %171 = arith.select %10, %165, %170 : vector<8x128xi1>, vector<8x128xf32>
    %172 = vector.extract_strided_slice %171 {offsets = [0, 0], sizes = [8, 32], strides = [1, 1]} : vector<8x128xf32> to vector<8x32xf32>
    %173 = vector.extract_strided_slice %171 {offsets = [0, 32], sizes = [8, 32], strides = [1, 1]} : vector<8x128xf32> to vector<8x32xf32>
    %174 = vector.extract_strided_slice %171 {offsets = [0, 64], sizes = [8, 32], strides = [1, 1]} : vector<8x128xf32> to vector<8x32xf32>
    %175 = vector.extract_strided_slice %171 {offsets = [0, 96], sizes = [8, 32], strides = [1, 1]} : vector<8x128xf32> to vector<8x32xf32>
    %176 = arith.mulf %173, %105 : vector<8x32xf32>
    %177 = arith.mulf %172, %174 : vector<8x32xf32>
    %178 = arith.addf %176, %177 : vector<8x32xf32>
    %179 = math.tanh %178 : vector<8x32xf32>
    %180 = arith.mulf %175, %179 : vector<8x32xf32>
    %181 = vector.broadcast %c2_i32 : i32 to vector<8x1xi32>
    %182 = arith.cmpi slt, %181, %0 : vector<8x1xi32>
    %cst_42 = arith.constant 0.000000e+00 : f32
    %183 = vector.shape_cast %182 : vector<8x1xi1> to vector<8x1xi1>
    %184 = vector.broadcast %183 : vector<8x1xi1> to vector<8x32xi1>
    %185 = vector.broadcast %cst_42 : f32 to vector<8x32xf32>
    %186 = arith.select %184, %180, %185 : vector<8x32xi1>, vector<8x32xf32>
    %187 = arith.index_cast %c2_i32 : i32 to index
    %c0_43 = arith.constant 0 : index
    %c0_44 = arith.constant 0 : index
    %188 = vector.load %arg8[%187, %c0_43, %c0_44] : memref<7x8x32xf32, #tpu.memory_space<vmem>>, vector<1x8x32xf32>
    %189 = vector.shape_cast %188 : vector<1x8x32xf32> to vector<8x32xf32>
    %190 = vector.shape_cast %186 : vector<8x32xf32> to vector<1x8x32xf32>
    tpu.vector_store %arg8[%187, %c0_43, %c0_44], %190 {strides = array<i32>} : memref<7x8x32xf32, #tpu.memory_space<vmem>>, vector<1x8x32xf32>,
    %c6_i32_45 = arith.constant 6 : i32
    %191 = arith.subi %c6_i32_45, %c2_i32 : i32
    %192 = arith.index_cast %191 : i32 to index
    %c0_46 = arith.constant 0 : index
    %c0_47 = arith.constant 0 : index
    %193 = vector.load %arg2[%192, %c0_46, %c0_47] : memref<7x8x32xf32, #tpu.memory_space<vmem>>, vector<1x8x32xf32>
    %194 = vector.shape_cast %193 : vector<1x8x32xf32> to vector<8x32xf32>
    %195 = tpu.concatenate %194, %146 in 1 : vector<8x32xf32>, vector<8x32xf32> -> vector<8x64xf32>
    %cst_48 = arith.constant dense<0.000000e+00> : vector<8x128xf32>
    %196 = tpu.matmul %195, %3, %cst_48 {dimension_numbers = #tpu.dot_dimension_numbers<[1], [0], [0], [1], [0, 0, 1, 1], [], []>} : vector<8x64xf32>, vector<64x128xf32>, vector<8x128xf32> -> vector<8x128xf32>
    %197 = vector.broadcast %4 : vector<1x128xf32> to vector<8x128xf32>
    %198 = arith.addf %196, %197 : vector<8x128xf32>
    %199 = math.tanh %198 : vector<8x128xf32>
    %200 = arith.negf %198 : vector<8x128xf32>
    %201 = math.exp %200 : vector<8x128xf32>
    %cst_49 = arith.constant 1.000000e+00 : f32
    %202 = vector.broadcast %cst_49 : f32 to vector<8x128xf32>
    %203 = arith.addf %202, %201 : vector<8x128xf32>
    %204 = arith.divf %202, %203 : vector<8x128xf32>
    %205 = arith.select %10, %199, %204 : vector<8x128xi1>, vector<8x128xf32>
    %206 = vector.extract_strided_slice %205 {offsets = [0, 0], sizes = [8, 32], strides = [1, 1]} : vector<8x128xf32> to vector<8x32xf32>
    %207 = vector.extract_strided_slice %205 {offsets = [0, 32], sizes = [8, 32], strides = [1, 1]} : vector<8x128xf32> to vector<8x32xf32>
    %208 = vector.extract_strided_slice %205 {offsets = [0, 64], sizes = [8, 32], strides = [1, 1]} : vector<8x128xf32> to vector<8x32xf32>
    %209 = vector.extract_strided_slice %205 {offsets = [0, 96], sizes = [8, 32], strides = [1, 1]} : vector<8x128xf32> to vector<8x32xf32>
    %210 = arith.mulf %207, %149 : vector<8x32xf32>
    %211 = arith.mulf %206, %208 : vector<8x32xf32>
    %212 = arith.addf %210, %211 : vector<8x32xf32>
    %213 = math.tanh %212 : vector<8x32xf32>
    %214 = arith.mulf %209, %213 : vector<8x32xf32>
    %215 = vector.broadcast %191 : i32 to vector<8x1xi32>
    %216 = arith.cmpi slt, %215, %0 : vector<8x1xi32>
    %217 = vector.shape_cast %216 : vector<8x1xi1> to vector<8x1xi1>
    %218 = vector.broadcast %217 : vector<8x1xi1> to vector<8x32xi1>
    %219 = arith.select %218, %214, %146 : vector<8x32xi1>, vector<8x32xf32>
    %220 = vector.shape_cast %216 : vector<8x1xi1> to vector<8x1xi1>
    %221 = vector.broadcast %220 : vector<8x1xi1> to vector<8x32xi1>
    %222 = arith.select %221, %212, %149 : vector<8x32xi1>, vector<8x32xf32>
    %cst_50 = arith.constant 0.000000e+00 : f32
    %223 = vector.shape_cast %216 : vector<8x1xi1> to vector<8x1xi1>
    %224 = vector.broadcast %223 : vector<8x1xi1> to vector<8x32xi1>
    %225 = vector.broadcast %cst_50 : f32 to vector<8x32xf32>
    %226 = arith.select %224, %214, %225 : vector<8x32xi1>, vector<8x32xf32>
    %227 = arith.index_cast %191 : i32 to index
    %c0_51 = arith.constant 0 : index
    %c0_52 = arith.constant 0 : index
    %228 = vector.load %arg9[%227, %c0_51, %c0_52] : memref<7x8x32xf32, #tpu.memory_space<vmem>>, vector<1x8x32xf32>
    %229 = vector.shape_cast %228 : vector<1x8x32xf32> to vector<8x32xf32>
    %230 = vector.shape_cast %226 : vector<8x32xf32> to vector<1x8x32xf32>
    tpu.vector_store %arg9[%227, %c0_51, %c0_52], %230 {strides = array<i32>} : memref<7x8x32xf32, #tpu.memory_space<vmem>>, vector<1x8x32xf32>,
    %c3_i32 = arith.constant 3 : i32
    %231 = arith.index_cast %c3_i32 : i32 to index
    %c0_53 = arith.constant 0 : index
    %c0_54 = arith.constant 0 : index
    %232 = vector.load %arg2[%231, %c0_53, %c0_54] : memref<7x8x32xf32, #tpu.memory_space<vmem>>, vector<1x8x32xf32>
    %233 = vector.shape_cast %232 : vector<1x8x32xf32> to vector<8x32xf32>
    %234 = tpu.concatenate %233, %180 in 1 : vector<8x32xf32>, vector<8x32xf32> -> vector<8x64xf32>
    %cst_55 = arith.constant dense<0.000000e+00> : vector<8x128xf32>
    %235 = tpu.matmul %234, %1, %cst_55 {dimension_numbers = #tpu.dot_dimension_numbers<[1], [0], [0], [1], [0, 0, 1, 1], [], []>} : vector<8x64xf32>, vector<64x128xf32>, vector<8x128xf32> -> vector<8x128xf32>
    %236 = vector.broadcast %2 : vector<1x128xf32> to vector<8x128xf32>
    %237 = arith.addf %235, %236 : vector<8x128xf32>
    %238 = math.tanh %237 : vector<8x128xf32>
    %239 = arith.negf %237 : vector<8x128xf32>
    %240 = math.exp %239 : vector<8x128xf32>
    %cst_56 = arith.constant 1.000000e+00 : f32
    %241 = vector.broadcast %cst_56 : f32 to vector<8x128xf32>
    %242 = arith.addf %241, %240 : vector<8x128xf32>
    %243 = arith.divf %241, %242 : vector<8x128xf32>
    %244 = arith.select %10, %238, %243 : vector<8x128xi1>, vector<8x128xf32>
    %245 = vector.extract_strided_slice %244 {offsets = [0, 0], sizes = [8, 32], strides = [1, 1]} : vector<8x128xf32> to vector<8x32xf32>
    %246 = vector.extract_strided_slice %244 {offsets = [0, 32], sizes = [8, 32], strides = [1, 1]} : vector<8x128xf32> to vector<8x32xf32>
    %247 = vector.extract_strided_slice %244 {offsets = [0, 64], sizes = [8, 32], strides = [1, 1]} : vector<8x128xf32> to vector<8x32xf32>
    %248 = vector.extract_strided_slice %244 {offsets = [0, 96], sizes = [8, 32], strides = [1, 1]} : vector<8x128xf32> to vector<8x32xf32>
    %249 = arith.mulf %246, %178 : vector<8x32xf32>
    %250 = arith.mulf %245, %247 : vector<8x32xf32>
    %251 = arith.addf %249, %250 : vector<8x32xf32>
    %252 = math.tanh %251 : vector<8x32xf32>
    %253 = arith.mulf %248, %252 : vector<8x32xf32>
    %254 = vector.broadcast %c3_i32 : i32 to vector<8x1xi32>
    %255 = arith.cmpi slt, %254, %0 : vector<8x1xi32>
    %cst_57 = arith.constant 0.000000e+00 : f32
    %256 = vector.shape_cast %255 : vector<8x1xi1> to vector<8x1xi1>
    %257 = vector.broadcast %256 : vector<8x1xi1> to vector<8x32xi1>
    %258 = vector.broadcast %cst_57 : f32 to vector<8x32xf32>
    %259 = arith.select %257, %253, %258 : vector<8x32xi1>, vector<8x32xf32>
    %260 = arith.index_cast %c3_i32 : i32 to index
    %c0_58 = arith.constant 0 : index
    %c0_59 = arith.constant 0 : index
    %261 = vector.load %arg8[%260, %c0_58, %c0_59] : memref<7x8x32xf32, #tpu.memory_space<vmem>>, vector<1x8x32xf32>
    %262 = vector.shape_cast %261 : vector<1x8x32xf32> to vector<8x32xf32>
    %263 = vector.shape_cast %259 : vector<8x32xf32> to vector<1x8x32xf32>
    tpu.vector_store %arg8[%260, %c0_58, %c0_59], %263 {strides = array<i32>} : memref<7x8x32xf32, #tpu.memory_space<vmem>>, vector<1x8x32xf32>,
    %c6_i32_60 = arith.constant 6 : i32
    %264 = arith.subi %c6_i32_60, %c3_i32 : i32
    %265 = arith.index_cast %264 : i32 to index
    %c0_61 = arith.constant 0 : index
    %c0_62 = arith.constant 0 : index
    %266 = vector.load %arg2[%265, %c0_61, %c0_62] : memref<7x8x32xf32, #tpu.memory_space<vmem>>, vector<1x8x32xf32>
    %267 = vector.shape_cast %266 : vector<1x8x32xf32> to vector<8x32xf32>
    %268 = tpu.concatenate %267, %219 in 1 : vector<8x32xf32>, vector<8x32xf32> -> vector<8x64xf32>
    %cst_63 = arith.constant dense<0.000000e+00> : vector<8x128xf32>
    %269 = tpu.matmul %268, %3, %cst_63 {dimension_numbers = #tpu.dot_dimension_numbers<[1], [0], [0], [1], [0, 0, 1, 1], [], []>} : vector<8x64xf32>, vector<64x128xf32>, vector<8x128xf32> -> vector<8x128xf32>
    %270 = vector.broadcast %4 : vector<1x128xf32> to vector<8x128xf32>
    %271 = arith.addf %269, %270 : vector<8x128xf32>
    %272 = math.tanh %271 : vector<8x128xf32>
    %273 = arith.negf %271 : vector<8x128xf32>
    %274 = math.exp %273 : vector<8x128xf32>
    %cst_64 = arith.constant 1.000000e+00 : f32
    %275 = vector.broadcast %cst_64 : f32 to vector<8x128xf32>
    %276 = arith.addf %275, %274 : vector<8x128xf32>
    %277 = arith.divf %275, %276 : vector<8x128xf32>
    %278 = arith.select %10, %272, %277 : vector<8x128xi1>, vector<8x128xf32>
    %279 = vector.extract_strided_slice %278 {offsets = [0, 0], sizes = [8, 32], strides = [1, 1]} : vector<8x128xf32> to vector<8x32xf32>
    %280 = vector.extract_strided_slice %278 {offsets = [0, 32], sizes = [8, 32], strides = [1, 1]} : vector<8x128xf32> to vector<8x32xf32>
    %281 = vector.extract_strided_slice %278 {offsets = [0, 64], sizes = [8, 32], strides = [1, 1]} : vector<8x128xf32> to vector<8x32xf32>
    %282 = vector.extract_strided_slice %278 {offsets = [0, 96], sizes = [8, 32], strides = [1, 1]} : vector<8x128xf32> to vector<8x32xf32>
    %283 = arith.mulf %280, %222 : vector<8x32xf32>
    %284 = arith.mulf %279, %281 : vector<8x32xf32>
    %285 = arith.addf %283, %284 : vector<8x32xf32>
    %286 = math.tanh %285 : vector<8x32xf32>
    %287 = arith.mulf %282, %286 : vector<8x32xf32>
    %288 = vector.broadcast %264 : i32 to vector<8x1xi32>
    %289 = arith.cmpi slt, %288, %0 : vector<8x1xi32>
    %290 = vector.shape_cast %289 : vector<8x1xi1> to vector<8x1xi1>
    %291 = vector.broadcast %290 : vector<8x1xi1> to vector<8x32xi1>
    %292 = arith.select %291, %287, %219 : vector<8x32xi1>, vector<8x32xf32>
    %293 = vector.shape_cast %289 : vector<8x1xi1> to vector<8x1xi1>
    %294 = vector.broadcast %293 : vector<8x1xi1> to vector<8x32xi1>
    %295 = arith.select %294, %285, %222 : vector<8x32xi1>, vector<8x32xf32>
    %cst_65 = arith.constant 0.000000e+00 : f32
    %296 = vector.shape_cast %289 : vector<8x1xi1> to vector<8x1xi1>
    %297 = vector.broadcast %296 : vector<8x1xi1> to vector<8x32xi1>
    %298 = vector.broadcast %cst_65 : f32 to vector<8x32xf32>
    %299 = arith.select %297, %287, %298 : vector<8x32xi1>, vector<8x32xf32>
    %300 = arith.index_cast %264 : i32 to index
    %c0_66 = arith.constant 0 : index
    %c0_67 = arith.constant 0 : index
    %301 = vector.load %arg9[%300, %c0_66, %c0_67] : memref<7x8x32xf32, #tpu.memory_space<vmem>>, vector<1x8x32xf32>
    %302 = vector.shape_cast %301 : vector<1x8x32xf32> to vector<8x32xf32>
    %303 = vector.shape_cast %299 : vector<8x32xf32> to vector<1x8x32xf32>
    tpu.vector_store %arg9[%300, %c0_66, %c0_67], %303 {strides = array<i32>} : memref<7x8x32xf32, #tpu.memory_space<vmem>>, vector<1x8x32xf32>,
    %c4_i32 = arith.constant 4 : i32
    %304 = arith.index_cast %c4_i32 : i32 to index
    %c0_68 = arith.constant 0 : index
    %c0_69 = arith.constant 0 : index
    %305 = vector.load %arg2[%304, %c0_68, %c0_69] : memref<7x8x32xf32, #tpu.memory_space<vmem>>, vector<1x8x32xf32>
    %306 = vector.shape_cast %305 : vector<1x8x32xf32> to vector<8x32xf32>
    %307 = tpu.concatenate %306, %253 in 1 : vector<8x32xf32>, vector<8x32xf32> -> vector<8x64xf32>
    %cst_70 = arith.constant dense<0.000000e+00> : vector<8x128xf32>
    %308 = tpu.matmul %307, %1, %cst_70 {dimension_numbers = #tpu.dot_dimension_numbers<[1], [0], [0], [1], [0, 0, 1, 1], [], []>} : vector<8x64xf32>, vector<64x128xf32>, vector<8x128xf32> -> vector<8x128xf32>
    %309 = vector.broadcast %2 : vector<1x128xf32> to vector<8x128xf32>
    %310 = arith.addf %308, %309 : vector<8x128xf32>
    %311 = math.tanh %310 : vector<8x128xf32>
    %312 = arith.negf %310 : vector<8x128xf32>
    %313 = math.exp %312 : vector<8x128xf32>
    %cst_71 = arith.constant 1.000000e+00 : f32
    %314 = vector.broadcast %cst_71 : f32 to vector<8x128xf32>
    %315 = arith.addf %314, %313 : vector<8x128xf32>
    %316 = arith.divf %314, %315 : vector<8x128xf32>
    %317 = arith.select %10, %311, %316 : vector<8x128xi1>, vector<8x128xf32>
    %318 = vector.extract_strided_slice %317 {offsets = [0, 0], sizes = [8, 32], strides = [1, 1]} : vector<8x128xf32> to vector<8x32xf32>
    %319 = vector.extract_strided_slice %317 {offsets = [0, 32], sizes = [8, 32], strides = [1, 1]} : vector<8x128xf32> to vector<8x32xf32>
    %320 = vector.extract_strided_slice %317 {offsets = [0, 64], sizes = [8, 32], strides = [1, 1]} : vector<8x128xf32> to vector<8x32xf32>
    %321 = vector.extract_strided_slice %317 {offsets = [0, 96], sizes = [8, 32], strides = [1, 1]} : vector<8x128xf32> to vector<8x32xf32>
    %322 = arith.mulf %319, %251 : vector<8x32xf32>
    %323 = arith.mulf %318, %320 : vector<8x32xf32>
    %324 = arith.addf %322, %323 : vector<8x32xf32>
    %325 = math.tanh %324 : vector<8x32xf32>
    %326 = arith.mulf %321, %325 : vector<8x32xf32>
    %327 = vector.broadcast %c4_i32 : i32 to vector<8x1xi32>
    %328 = arith.cmpi slt, %327, %0 : vector<8x1xi32>
    %cst_72 = arith.constant 0.000000e+00 : f32
    %329 = vector.shape_cast %328 : vector<8x1xi1> to vector<8x1xi1>
    %330 = vector.broadcast %329 : vector<8x1xi1> to vector<8x32xi1>
    %331 = vector.broadcast %cst_72 : f32 to vector<8x32xf32>
    %332 = arith.select %330, %326, %331 : vector<8x32xi1>, vector<8x32xf32>
    %333 = arith.index_cast %c4_i32 : i32 to index
    %c0_73 = arith.constant 0 : index
    %c0_74 = arith.constant 0 : index
    %334 = vector.load %arg8[%333, %c0_73, %c0_74] : memref<7x8x32xf32, #tpu.memory_space<vmem>>, vector<1x8x32xf32>
    %335 = vector.shape_cast %334 : vector<1x8x32xf32> to vector<8x32xf32>
    %336 = vector.shape_cast %332 : vector<8x32xf32> to vector<1x8x32xf32>
    tpu.vector_store %arg8[%333, %c0_73, %c0_74], %336 {strides = array<i32>} : memref<7x8x32xf32, #tpu.memory_space<vmem>>, vector<1x8x32xf32>,
    %c6_i32_75 = arith.constant 6 : i32
    %337 = arith.subi %c6_i32_75, %c4_i32 : i32
    %338 = arith.index_cast %337 : i32 to index
    %c0_76 = arith.constant 0 : index
    %c0_77 = arith.constant 0 : index
    %339 = vector.load %arg2[%338, %c0_76, %c0_77] : memref<7x8x32xf32, #tpu.memory_space<vmem>>, vector<1x8x32xf32>
    %340 = vector.shape_cast %339 : vector<1x8x32xf32> to vector<8x32xf32>
    %341 = tpu.concatenate %340, %292 in 1 : vector<8x32xf32>, vector<8x32xf32> -> vector<8x64xf32>
    %cst_78 = arith.constant dense<0.000000e+00> : vector<8x128xf32>
    %342 = tpu.matmul %341, %3, %cst_78 {dimension_numbers = #tpu.dot_dimension_numbers<[1], [0], [0], [1], [0, 0, 1, 1], [], []>} : vector<8x64xf32>, vector<64x128xf32>, vector<8x128xf32> -> vector<8x128xf32>
    %343 = vector.broadcast %4 : vector<1x128xf32> to vector<8x128xf32>
    %344 = arith.addf %342, %343 : vector<8x128xf32>
    %345 = math.tanh %344 : vector<8x128xf32>
    %346 = arith.negf %344 : vector<8x128xf32>
    %347 = math.exp %346 : vector<8x128xf32>
    %cst_79 = arith.constant 1.000000e+00 : f32
    %348 = vector.broadcast %cst_79 : f32 to vector<8x128xf32>
    %349 = arith.addf %348, %347 : vector<8x128xf32>
    %350 = arith.divf %348, %349 : vector<8x128xf32>
    %351 = arith.select %10, %345, %350 : vector<8x128xi1>, vector<8x128xf32>
    %352 = vector.extract_strided_slice %351 {offsets = [0, 0], sizes = [8, 32], strides = [1, 1]} : vector<8x128xf32> to vector<8x32xf32>
    %353 = vector.extract_strided_slice %351 {offsets = [0, 32], sizes = [8, 32], strides = [1, 1]} : vector<8x128xf32> to vector<8x32xf32>
    %354 = vector.extract_strided_slice %351 {offsets = [0, 64], sizes = [8, 32], strides = [1, 1]} : vector<8x128xf32> to vector<8x32xf32>
    %355 = vector.extract_strided_slice %351 {offsets = [0, 96], sizes = [8, 32], strides = [1, 1]} : vector<8x128xf32> to vector<8x32xf32>
    %356 = arith.mulf %353, %295 : vector<8x32xf32>
    %357 = arith.mulf %352, %354 : vector<8x32xf32>
    %358 = arith.addf %356, %357 : vector<8x32xf32>
    %359 = math.tanh %358 : vector<8x32xf32>
    %360 = arith.mulf %355, %359 : vector<8x32xf32>
    %361 = vector.broadcast %337 : i32 to vector<8x1xi32>
    %362 = arith.cmpi slt, %361, %0 : vector<8x1xi32>
    %363 = vector.shape_cast %362 : vector<8x1xi1> to vector<8x1xi1>
    %364 = vector.broadcast %363 : vector<8x1xi1> to vector<8x32xi1>
    %365 = arith.select %364, %360, %292 : vector<8x32xi1>, vector<8x32xf32>
    %366 = vector.shape_cast %362 : vector<8x1xi1> to vector<8x1xi1>
    %367 = vector.broadcast %366 : vector<8x1xi1> to vector<8x32xi1>
    %368 = arith.select %367, %358, %295 : vector<8x32xi1>, vector<8x32xf32>
    %cst_80 = arith.constant 0.000000e+00 : f32
    %369 = vector.shape_cast %362 : vector<8x1xi1> to vector<8x1xi1>
    %370 = vector.broadcast %369 : vector<8x1xi1> to vector<8x32xi1>
    %371 = vector.broadcast %cst_80 : f32 to vector<8x32xf32>
    %372 = arith.select %370, %360, %371 : vector<8x32xi1>, vector<8x32xf32>
    %373 = arith.index_cast %337 : i32 to index
    %c0_81 = arith.constant 0 : index
    %c0_82 = arith.constant 0 : index
    %374 = vector.load %arg9[%373, %c0_81, %c0_82] : memref<7x8x32xf32, #tpu.memory_space<vmem>>, vector<1x8x32xf32>
    %375 = vector.shape_cast %374 : vector<1x8x32xf32> to vector<8x32xf32>
    %376 = vector.shape_cast %372 : vector<8x32xf32> to vector<1x8x32xf32>
    tpu.vector_store %arg9[%373, %c0_81, %c0_82], %376 {strides = array<i32>} : memref<7x8x32xf32, #tpu.memory_space<vmem>>, vector<1x8x32xf32>,
    %c5_i32 = arith.constant 5 : i32
    %377 = arith.index_cast %c5_i32 : i32 to index
    %c0_83 = arith.constant 0 : index
    %c0_84 = arith.constant 0 : index
    %378 = vector.load %arg2[%377, %c0_83, %c0_84] : memref<7x8x32xf32, #tpu.memory_space<vmem>>, vector<1x8x32xf32>
    %379 = vector.shape_cast %378 : vector<1x8x32xf32> to vector<8x32xf32>
    %380 = tpu.concatenate %379, %326 in 1 : vector<8x32xf32>, vector<8x32xf32> -> vector<8x64xf32>
    %cst_85 = arith.constant dense<0.000000e+00> : vector<8x128xf32>
    %381 = tpu.matmul %380, %1, %cst_85 {dimension_numbers = #tpu.dot_dimension_numbers<[1], [0], [0], [1], [0, 0, 1, 1], [], []>} : vector<8x64xf32>, vector<64x128xf32>, vector<8x128xf32> -> vector<8x128xf32>
    %382 = vector.broadcast %2 : vector<1x128xf32> to vector<8x128xf32>
    %383 = arith.addf %381, %382 : vector<8x128xf32>
    %384 = math.tanh %383 : vector<8x128xf32>
    %385 = arith.negf %383 : vector<8x128xf32>
    %386 = math.exp %385 : vector<8x128xf32>
    %cst_86 = arith.constant 1.000000e+00 : f32
    %387 = vector.broadcast %cst_86 : f32 to vector<8x128xf32>
    %388 = arith.addf %387, %386 : vector<8x128xf32>
    %389 = arith.divf %387, %388 : vector<8x128xf32>
    %390 = arith.select %10, %384, %389 : vector<8x128xi1>, vector<8x128xf32>
    %391 = vector.extract_strided_slice %390 {offsets = [0, 0], sizes = [8, 32], strides = [1, 1]} : vector<8x128xf32> to vector<8x32xf32>
    %392 = vector.extract_strided_slice %390 {offsets = [0, 32], sizes = [8, 32], strides = [1, 1]} : vector<8x128xf32> to vector<8x32xf32>
    %393 = vector.extract_strided_slice %390 {offsets = [0, 64], sizes = [8, 32], strides = [1, 1]} : vector<8x128xf32> to vector<8x32xf32>
    %394 = vector.extract_strided_slice %390 {offsets = [0, 96], sizes = [8, 32], strides = [1, 1]} : vector<8x128xf32> to vector<8x32xf32>
    %395 = arith.mulf %392, %324 : vector<8x32xf32>
    %396 = arith.mulf %391, %393 : vector<8x32xf32>
    %397 = arith.addf %395, %396 : vector<8x32xf32>
    %398 = math.tanh %397 : vector<8x32xf32>
    %399 = arith.mulf %394, %398 : vector<8x32xf32>
    %400 = vector.broadcast %c5_i32 : i32 to vector<8x1xi32>
    %401 = arith.cmpi slt, %400, %0 : vector<8x1xi32>
    %cst_87 = arith.constant 0.000000e+00 : f32
    %402 = vector.shape_cast %401 : vector<8x1xi1> to vector<8x1xi1>
    %403 = vector.broadcast %402 : vector<8x1xi1> to vector<8x32xi1>
    %404 = vector.broadcast %cst_87 : f32 to vector<8x32xf32>
    %405 = arith.select %403, %399, %404 : vector<8x32xi1>, vector<8x32xf32>
    %406 = arith.index_cast %c5_i32 : i32 to index
    %c0_88 = arith.constant 0 : index
    %c0_89 = arith.constant 0 : index
    %407 = vector.load %arg8[%406, %c0_88, %c0_89] : memref<7x8x32xf32, #tpu.memory_space<vmem>>, vector<1x8x32xf32>
    %408 = vector.shape_cast %407 : vector<1x8x32xf32> to vector<8x32xf32>
    %409 = vector.shape_cast %405 : vector<8x32xf32> to vector<1x8x32xf32>
    tpu.vector_store %arg8[%406, %c0_88, %c0_89], %409 {strides = array<i32>} : memref<7x8x32xf32, #tpu.memory_space<vmem>>, vector<1x8x32xf32>,
    %c6_i32_90 = arith.constant 6 : i32
    %410 = arith.subi %c6_i32_90, %c5_i32 : i32
    %411 = arith.index_cast %410 : i32 to index
    %c0_91 = arith.constant 0 : index
    %c0_92 = arith.constant 0 : index
    %412 = vector.load %arg2[%411, %c0_91, %c0_92] : memref<7x8x32xf32, #tpu.memory_space<vmem>>, vector<1x8x32xf32>
    %413 = vector.shape_cast %412 : vector<1x8x32xf32> to vector<8x32xf32>
    %414 = tpu.concatenate %413, %365 in 1 : vector<8x32xf32>, vector<8x32xf32> -> vector<8x64xf32>
    %cst_93 = arith.constant dense<0.000000e+00> : vector<8x128xf32>
    %415 = tpu.matmul %414, %3, %cst_93 {dimension_numbers = #tpu.dot_dimension_numbers<[1], [0], [0], [1], [0, 0, 1, 1], [], []>} : vector<8x64xf32>, vector<64x128xf32>, vector<8x128xf32> -> vector<8x128xf32>
    %416 = vector.broadcast %4 : vector<1x128xf32> to vector<8x128xf32>
    %417 = arith.addf %415, %416 : vector<8x128xf32>
    %418 = math.tanh %417 : vector<8x128xf32>
    %419 = arith.negf %417 : vector<8x128xf32>
    %420 = math.exp %419 : vector<8x128xf32>
    %cst_94 = arith.constant 1.000000e+00 : f32
    %421 = vector.broadcast %cst_94 : f32 to vector<8x128xf32>
    %422 = arith.addf %421, %420 : vector<8x128xf32>
    %423 = arith.divf %421, %422 : vector<8x128xf32>
    %424 = arith.select %10, %418, %423 : vector<8x128xi1>, vector<8x128xf32>
    %425 = vector.extract_strided_slice %424 {offsets = [0, 0], sizes = [8, 32], strides = [1, 1]} : vector<8x128xf32> to vector<8x32xf32>
    %426 = vector.extract_strided_slice %424 {offsets = [0, 32], sizes = [8, 32], strides = [1, 1]} : vector<8x128xf32> to vector<8x32xf32>
    %427 = vector.extract_strided_slice %424 {offsets = [0, 64], sizes = [8, 32], strides = [1, 1]} : vector<8x128xf32> to vector<8x32xf32>
    %428 = vector.extract_strided_slice %424 {offsets = [0, 96], sizes = [8, 32], strides = [1, 1]} : vector<8x128xf32> to vector<8x32xf32>
    %429 = arith.mulf %426, %368 : vector<8x32xf32>
    %430 = arith.mulf %425, %427 : vector<8x32xf32>
    %431 = arith.addf %429, %430 : vector<8x32xf32>
    %432 = math.tanh %431 : vector<8x32xf32>
    %433 = arith.mulf %428, %432 : vector<8x32xf32>
    %434 = vector.broadcast %410 : i32 to vector<8x1xi32>
    %435 = arith.cmpi slt, %434, %0 : vector<8x1xi32>
    %436 = vector.shape_cast %435 : vector<8x1xi1> to vector<8x1xi1>
    %437 = vector.broadcast %436 : vector<8x1xi1> to vector<8x32xi1>
    %438 = arith.select %437, %433, %365 : vector<8x32xi1>, vector<8x32xf32>
    %439 = vector.shape_cast %435 : vector<8x1xi1> to vector<8x1xi1>
    %440 = vector.broadcast %439 : vector<8x1xi1> to vector<8x32xi1>
    %441 = arith.select %440, %431, %368 : vector<8x32xi1>, vector<8x32xf32>
    %cst_95 = arith.constant 0.000000e+00 : f32
    %442 = vector.shape_cast %435 : vector<8x1xi1> to vector<8x1xi1>
    %443 = vector.broadcast %442 : vector<8x1xi1> to vector<8x32xi1>
    %444 = vector.broadcast %cst_95 : f32 to vector<8x32xf32>
    %445 = arith.select %443, %433, %444 : vector<8x32xi1>, vector<8x32xf32>
    %446 = arith.index_cast %410 : i32 to index
    %c0_96 = arith.constant 0 : index
    %c0_97 = arith.constant 0 : index
    %447 = vector.load %arg9[%446, %c0_96, %c0_97] : memref<7x8x32xf32, #tpu.memory_space<vmem>>, vector<1x8x32xf32>
    %448 = vector.shape_cast %447 : vector<1x8x32xf32> to vector<8x32xf32>
    %449 = vector.shape_cast %445 : vector<8x32xf32> to vector<1x8x32xf32>
    tpu.vector_store %arg9[%446, %c0_96, %c0_97], %449 {strides = array<i32>} : memref<7x8x32xf32, #tpu.memory_space<vmem>>, vector<1x8x32xf32>,
    %c6_i32_98 = arith.constant 6 : i32
    %450 = arith.index_cast %c6_i32_98 : i32 to index
    %c0_99 = arith.constant 0 : index
    %c0_100 = arith.constant 0 : index
    %451 = vector.load %arg2[%450, %c0_99, %c0_100] : memref<7x8x32xf32, #tpu.memory_space<vmem>>, vector<1x8x32xf32>
    %452 = vector.shape_cast %451 : vector<1x8x32xf32> to vector<8x32xf32>
    %453 = tpu.concatenate %452, %399 in 1 : vector<8x32xf32>, vector<8x32xf32> -> vector<8x64xf32>
    %cst_101 = arith.constant dense<0.000000e+00> : vector<8x128xf32>
    %454 = tpu.matmul %453, %1, %cst_101 {dimension_numbers = #tpu.dot_dimension_numbers<[1], [0], [0], [1], [0, 0, 1, 1], [], []>} : vector<8x64xf32>, vector<64x128xf32>, vector<8x128xf32> -> vector<8x128xf32>
    %455 = vector.broadcast %2 : vector<1x128xf32> to vector<8x128xf32>
    %456 = arith.addf %454, %455 : vector<8x128xf32>
    %457 = math.tanh %456 : vector<8x128xf32>
    %458 = arith.negf %456 : vector<8x128xf32>
    %459 = math.exp %458 : vector<8x128xf32>
    %cst_102 = arith.constant 1.000000e+00 : f32
    %460 = vector.broadcast %cst_102 : f32 to vector<8x128xf32>
    %461 = arith.addf %460, %459 : vector<8x128xf32>
    %462 = arith.divf %460, %461 : vector<8x128xf32>
    %463 = arith.select %10, %457, %462 : vector<8x128xi1>, vector<8x128xf32>
    %464 = vector.extract_strided_slice %463 {offsets = [0, 0], sizes = [8, 32], strides = [1, 1]} : vector<8x128xf32> to vector<8x32xf32>
    %465 = vector.extract_strided_slice %463 {offsets = [0, 32], sizes = [8, 32], strides = [1, 1]} : vector<8x128xf32> to vector<8x32xf32>
    %466 = vector.extract_strided_slice %463 {offsets = [0, 64], sizes = [8, 32], strides = [1, 1]} : vector<8x128xf32> to vector<8x32xf32>
    %467 = vector.extract_strided_slice %463 {offsets = [0, 96], sizes = [8, 32], strides = [1, 1]} : vector<8x128xf32> to vector<8x32xf32>
    %468 = arith.mulf %465, %397 : vector<8x32xf32>
    %469 = arith.mulf %464, %466 : vector<8x32xf32>
    %470 = arith.addf %468, %469 : vector<8x32xf32>
    %471 = math.tanh %470 : vector<8x32xf32>
    %472 = arith.mulf %467, %471 : vector<8x32xf32>
    %473 = vector.broadcast %c6_i32_98 : i32 to vector<8x1xi32>
    %474 = arith.cmpi slt, %473, %0 : vector<8x1xi32>
    %cst_103 = arith.constant 0.000000e+00 : f32
    %475 = vector.shape_cast %474 : vector<8x1xi1> to vector<8x1xi1>
    %476 = vector.broadcast %475 : vector<8x1xi1> to vector<8x32xi1>
    %477 = vector.broadcast %cst_103 : f32 to vector<8x32xf32>
    %478 = arith.select %476, %472, %477 : vector<8x32xi1>, vector<8x32xf32>
    %479 = arith.index_cast %c6_i32_98 : i32 to index
    %c0_104 = arith.constant 0 : index
    %c0_105 = arith.constant 0 : index
    %480 = vector.load %arg8[%479, %c0_104, %c0_105] : memref<7x8x32xf32, #tpu.memory_space<vmem>>, vector<1x8x32xf32>
    %481 = vector.shape_cast %480 : vector<1x8x32xf32> to vector<8x32xf32>
    %482 = vector.shape_cast %478 : vector<8x32xf32> to vector<1x8x32xf32>
    tpu.vector_store %arg8[%479, %c0_104, %c0_105], %482 {strides = array<i32>} : memref<7x8x32xf32, #tpu.memory_space<vmem>>, vector<1x8x32xf32>,
    %c6_i32_106 = arith.constant 6 : i32
    %483 = arith.subi %c6_i32_106, %c6_i32_98 : i32
    %484 = arith.index_cast %483 : i32 to index
    %c0_107 = arith.constant 0 : index
    %c0_108 = arith.constant 0 : index
    %485 = vector.load %arg2[%484, %c0_107, %c0_108] : memref<7x8x32xf32, #tpu.memory_space<vmem>>, vector<1x8x32xf32>
    %486 = vector.shape_cast %485 : vector<1x8x32xf32> to vector<8x32xf32>
    %487 = tpu.concatenate %486, %438 in 1 : vector<8x32xf32>, vector<8x32xf32> -> vector<8x64xf32>
    %cst_109 = arith.constant dense<0.000000e+00> : vector<8x128xf32>
    %488 = tpu.matmul %487, %3, %cst_109 {dimension_numbers = #tpu.dot_dimension_numbers<[1], [0], [0], [1], [0, 0, 1, 1], [], []>} : vector<8x64xf32>, vector<64x128xf32>, vector<8x128xf32> -> vector<8x128xf32>
    %489 = vector.broadcast %4 : vector<1x128xf32> to vector<8x128xf32>
    %490 = arith.addf %488, %489 : vector<8x128xf32>
    %491 = math.tanh %490 : vector<8x128xf32>
    %492 = arith.negf %490 : vector<8x128xf32>
    %493 = math.exp %492 : vector<8x128xf32>
    %cst_110 = arith.constant 1.000000e+00 : f32
    %494 = vector.broadcast %cst_110 : f32 to vector<8x128xf32>
    %495 = arith.addf %494, %493 : vector<8x128xf32>
    %496 = arith.divf %494, %495 : vector<8x128xf32>
    %497 = arith.select %10, %491, %496 : vector<8x128xi1>, vector<8x128xf32>
    %498 = vector.extract_strided_slice %497 {offsets = [0, 0], sizes = [8, 32], strides = [1, 1]} : vector<8x128xf32> to vector<8x32xf32>
    %499 = vector.extract_strided_slice %497 {offsets = [0, 32], sizes = [8, 32], strides = [1, 1]} : vector<8x128xf32> to vector<8x32xf32>
    %500 = vector.extract_strided_slice %497 {offsets = [0, 64], sizes = [8, 32], strides = [1, 1]} : vector<8x128xf32> to vector<8x32xf32>
    %501 = vector.extract_strided_slice %497 {offsets = [0, 96], sizes = [8, 32], strides = [1, 1]} : vector<8x128xf32> to vector<8x32xf32>
    %502 = arith.mulf %499, %441 : vector<8x32xf32>
    %503 = arith.mulf %498, %500 : vector<8x32xf32>
    %504 = arith.addf %502, %503 : vector<8x32xf32>
    %505 = math.tanh %504 : vector<8x32xf32>
    %506 = arith.mulf %501, %505 : vector<8x32xf32>
    %507 = vector.broadcast %483 : i32 to vector<8x1xi32>
    %508 = arith.cmpi slt, %507, %0 : vector<8x1xi32>
    %509 = vector.shape_cast %508 : vector<8x1xi1> to vector<8x1xi1>
    %510 = vector.broadcast %509 : vector<8x1xi1> to vector<8x32xi1>
    %511 = arith.select %510, %506, %438 : vector<8x32xi1>, vector<8x32xf32>
    %512 = vector.shape_cast %508 : vector<8x1xi1> to vector<8x1xi1>
    %513 = vector.broadcast %512 : vector<8x1xi1> to vector<8x32xi1>
    %514 = arith.select %513, %504, %441 : vector<8x32xi1>, vector<8x32xf32>
    %cst_111 = arith.constant 0.000000e+00 : f32
    %515 = vector.shape_cast %508 : vector<8x1xi1> to vector<8x1xi1>
    %516 = vector.broadcast %515 : vector<8x1xi1> to vector<8x32xi1>
    %517 = vector.broadcast %cst_111 : f32 to vector<8x32xf32>
    %518 = arith.select %516, %506, %517 : vector<8x32xi1>, vector<8x32xf32>
    %519 = arith.index_cast %483 : i32 to index
    %c0_112 = arith.constant 0 : index
    %c0_113 = arith.constant 0 : index
    %520 = vector.load %arg9[%519, %c0_112, %c0_113] : memref<7x8x32xf32, #tpu.memory_space<vmem>>, vector<1x8x32xf32>
    %521 = vector.shape_cast %520 : vector<1x8x32xf32> to vector<8x32xf32>
    %522 = vector.shape_cast %518 : vector<8x32xf32> to vector<1x8x32xf32>
    tpu.vector_store %arg9[%519, %c0_112, %c0_113], %522 {strides = array<i32>} : memref<7x8x32xf32, #tpu.memory_space<vmem>>, vector<1x8x32xf32>,
    %c7_i32 = arith.constant 7 : i32
    %c0_114 = arith.constant 0 : index
    %c0_115 = arith.constant 0 : index
    %c0_116 = arith.constant 0 : index
    %523 = vector.load %arg8[%c0_114, %c0_115, %c0_116] : memref<7x8x32xf32, #tpu.memory_space<vmem>>, vector<7x8x32xf32>
    %c0_117 = arith.constant 0 : index
    %c0_118 = arith.constant 0 : index
    %c0_119 = arith.constant 0 : index
    %524 = vector.load %arg7[%c0_117, %c0_118, %c0_119] : memref<7x8x64xf32, #tpu.memory_space<vmem>>, vector<7x8x32xf32>
    tpu.vector_store %arg7[%c0_117, %c0_118, %c0_119], %523 {strides = array<i32>} : memref<7x8x64xf32, #tpu.memory_space<vmem>>, vector<7x8x32xf32>,
    %c0_120 = arith.constant 0 : index
    %c0_121 = arith.constant 0 : index
    %c0_122 = arith.constant 0 : index
    %525 = vector.load %arg9[%c0_120, %c0_121, %c0_122] : memref<7x8x32xf32, #tpu.memory_space<vmem>>, vector<7x8x32xf32>
    %c0_123 = arith.constant 0 : index
    %c0_124 = arith.constant 0 : index
    %c32 = arith.constant 32 : index
    %526 = vector.load %arg7[%c0_123, %c0_124, %c32] : memref<7x8x64xf32, #tpu.memory_space<vmem>>, vector<7x8x32xf32>
    tpu.vector_store %arg7[%c0_123, %c0_124, %c32], %525 {strides = array<i32>} : memref<7x8x64xf32, #tpu.memory_space<vmem>>, vector<7x8x32xf32>,
    return
  }
  func.func @transform_0(%arg0: i32) -> (i32, i32) {
    %c0_i32 = arith.constant 0 : i32
    %c0_i32_0 = arith.constant 0 : i32
    %c0_i32_1 = arith.constant 0 : i32
    return %c0_i32, %c0_i32_0 : i32, i32
  }
  func.func @transform_1(%arg0: i32) -> (i32, i32, i32) {
    %c0_i32 = arith.constant 0 : i32
    %c0_i32_0 = arith.constant 0 : i32
    %c0_i32_1 = arith.constant 0 : i32
    %c0_i32_2 = arith.constant 0 : i32
    return %c0_i32, %c0_i32_0, %c0_i32_1 : i32, i32, i32
  }
  func.func @transform_2(%arg0: i32) -> (i32, i32) {
    %c0_i32 = arith.constant 0 : i32
    %c0_i32_0 = arith.constant 0 : i32
    %c0_i32_1 = arith.constant 0 : i32
    return %c0_i32, %c0_i32_0 : i32, i32
  }
  func.func @transform_3(%arg0: i32) -> (i32, i32) {
    %c0_i32 = arith.constant 0 : i32
    %c0_i32_0 = arith.constant 0 : i32
    %c0_i32_1 = arith.constant 0 : i32
    return %c0_i32, %c0_i32_0 : i32, i32
  }
  func.func @transform_4(%arg0: i32) -> (i32, i32) {
    %c0_i32 = arith.constant 0 : i32
    %c0_i32_0 = arith.constant 0 : i32
    %c0_i32_1 = arith.constant 0 : i32
    return %c0_i32, %c0_i32_0 : i32, i32
  }
  func.func @transform_5(%arg0: i32) -> (i32, i32) {
    %c0_i32 = arith.constant 0 : i32
    %c0_i32_0 = arith.constant 0 : i32
    %c0_i32_1 = arith.constant 0 : i32
    return %c0_i32, %c0_i32_0 : i32, i32
  }
  func.func @transform_6(%arg0: i32) -> (i32, i32, i32) {
    %c0_i32 = arith.constant 0 : i32
    %c0_i32_0 = arith.constant 0 : i32
    %c0_i32_1 = arith.constant 0 : i32
    %c0_i32_2 = arith.constant 0 : i32
    return %c0_i32, %c0_i32_0, %c0_i32_1 : i32, i32, i32
  }
}

</mosaic_0001>

<llo_original>
// kernel: tpu_custom_call.1
$region0: #{tpu_custom_call.1}
  #allocation0 [shape = 'u32[]', space=smem, size = 0x4, offset = 0x4, fixed_abs, tag = 'smem constant byte address 0x4 - core index']
  #allocation1 [shape = 'u32[72,128]{1,0:T(1,128)}', space=vmem, size = 0x9000, scoped, tag = 'internal scratch']
  #allocation2 [shape = 'f32[7,8,32]{2,1,0:T(8,128)}', space=vmem, size = 0x7000, scoped, tag = 'scratch operand']
  #allocation3 [shape = 'f32[7,8,32]{2,1,0:T(8,128)}', space=vmem, size = 0x7000, scoped, tag = 'scratch operand']
  %s0 = inlined_call_operand.vmem [shape: s32[8,1], index: 0, kind: input, shape index: {}]
  %s1 = inlined_call_operand.hbm [shape: f32[7,8,32], index: 1, kind: input, shape index: {}]
  %s2 = inlined_call_operand.hbm [shape: f32[64,128], index: 2, kind: input, shape index: {}]
  %s3 = inlined_call_operand.vmem [shape: f32[1,128], index: 3, kind: input, shape index: {}]
  %s4 = inlined_call_operand.hbm [shape: f32[64,128], index: 4, kind: input, shape index: {}]
  %s5 = inlined_call_operand.vmem [shape: f32[1,128], index: 5, kind: input, shape index: {}]
  %s6 = inlined_call_operand.hbm [shape: f32[7,8,64], index: 6, kind: output, shape index: {}]
  %s7 = sld [smem:[#allocation0]]
  $region46: #{tpu_custom_call.1} parent=0
    _
  %s9 = ssub.s32 1, %s7
  %s10 = scalar_select 0, %s9, %s7
  $region1: #{tpu_custom_call.1} parent=0
    #allocation4 [shape = 'u8[28672]{0}', space=vmem, size = 0x7000, scoped, tag = 'input window, operand 1, single buffered']
    #allocation5 [shape = 's32[1]{0}', space=sflag, size = 0x4, scoped, tag = 'scoped memory for tpu_custom_call.1']
    #allocation6 [shape = 's32[1]{0}', space=sflag, size = 0x4, scoped, tag = 'scoped memory for tpu_custom_call.1']
    #allocation7 [shape = 'u8[32768]{0}', space=vmem, size = 0x8000, scoped, tag = 'input window, operand 2, single buffered']
    #allocation8 [shape = 's32[1]{0}', space=sflag, size = 0x4, scoped, tag = 'scoped memory for tpu_custom_call.1']
    #allocation9 [shape = 'u8[32768]{0}', space=vmem, size = 0x8000, scoped, tag = 'input window, operand 4, single buffered']
    #allocation10 [shape = 'u8[28672]{0}', space=vmem, size = 0x7000, scoped, tag = 'output window, operand 0, single buffered']
    %11 = vsyncpa [#allocation5], 0
    %12 = vsyncpa [#allocation8], 0
    %13 = vsyncpa [#allocation6], 0
    // Predicated region
    $region2: #{tpu_custom_call.1} parent=1 // pred_check
      _
    $region3: #{tpu_custom_call.1} parent=1 // pred_check_branch
      %15 = sbr.rel (0) target = $region5
    $region4: #{tpu_custom_call.1} parent=1 // pred_region
      _
    $region5: #{tpu_custom_call.1} parent=1 // pred_fallthru
      _
    // Predicated region
    $region6: #{tpu_custom_call.1} parent=1 // pred_check
      _
    $region7: #{tpu_custom_call.1} parent=1 // pred_check_branch
      %17 = sbr.rel (0) target = $region9
    $region8: #{tpu_custom_call.1} parent=1 // pred_region
      %19 = vsyncadd [#allocation5], 0
      %s20 = sshll.u32 %s1, 4
      %s21 = int_to_ptr.hbm [resolvable:$true] %s20
      %s22 = sshll.u32 [#allocation4], 4
      %s23 = int_to_ptr.vmem [resolvable:$true] %s22
      %28 = dma.hbm_to_vmem [thread:$0]  %s21, 896, %s23, [#allocation5], 128, 128, 8
    $region9: #{tpu_custom_call.1} parent=1 // pred_fallthru
      _
    // Predicated region
    $region10: #{tpu_custom_call.1} parent=1 // pred_check
      _
    $region11: #{tpu_custom_call.1} parent=1 // pred_check_branch
      %30 = sbr.rel (0) target = $region13
    $region12: #{tpu_custom_call.1} parent=1 // pred_region
      %32 = vsyncadd [#allocation8], 0
      %s33 = sshll.u32 %s2, 4
      %s34 = int_to_ptr.hbm [resolvable:$true] %s33
      %s35 = sshll.u32 [#allocation7], 4
      %s36 = int_to_ptr.vmem [resolvable:$true] %s35
      %41 = dma.hbm_to_vmem [thread:$0]  %s34, 1024, %s36, [#allocation8], 128, 128, 8
    $region13: #{tpu_custom_call.1} parent=1 // pred_fallthru
      _
    // Predicated region
    $region14: #{tpu_custom_call.1} parent=1 // pred_check
      _
    $region15: #{tpu_custom_call.1} parent=1 // pred_check_branch
      %43 = sbr.rel (0) target = $region17
    $region16: #{tpu_custom_call.1} parent=1 // pred_region
      _
    $region17: #{tpu_custom_call.1} parent=1 // pred_fallthru
      _
    // Predicated region
    $region18: #{tpu_custom_call.1} parent=1 // pred_check
      _
    $region19: #{tpu_custom_call.1} parent=1 // pred_check_branch
      %45 = sbr.rel (0) target = $region21
    $region20: #{tpu_custom_call.1} parent=1 // pred_region
      %47 = vsyncadd [#allocation8], 0
      %s48 = sshll.u32 %s4, 4
      %s49 = int_to_ptr.hbm [resolvable:$true] %s48
      %s50 = sshll.u32 [#allocation9], 4
      %s51 = int_to_ptr.vmem [resolvable:$true] %s50
      %56 = dma.hbm_to_vmem [thread:$0]  %s49, 1024, %s51, [#allocation8], 128, 128, 8
    $region21: #{tpu_custom_call.1} parent=1 // pred_fallthru
      _
    // Predicated region
    $region22: #{tpu_custom_call.1} parent=1 // pred_check
      _
    $region23: #{tpu_custom_call.1} parent=1 // pred_check_branch
      %58 = sbr.rel (0) target = $region25
    $region24: #{tpu_custom_call.1} parent=1 // pred_region
      _
    $region25: #{tpu_custom_call.1} parent=1 // pred_fallthru
      _
    // Predicated region
    $region26: #{tpu_custom_call.1} parent=1 // pred_check
      _
    $region27: #{tpu_custom_call.1} parent=1 // pred_check_branch
      %60 = sbr.rel (0) target = $region29
    $region28: #{tpu_custom_call.1} parent=1 // pred_region
      %62 = dma.done [#allocation5], 896
    $region29: #{tpu_custom_call.1} parent=1 // pred_fallthru
      _
    // Predicated region
    $region30: #{tpu_custom_call.1} parent=1 // pred_check
      _
    $region31: #{tpu_custom_call.1} parent=1 // pred_check_branch
      %64 = sbr.rel (0) target = $region33
    $region32: #{tpu_custom_call.1} parent=1 // pred_region
      %66 = dma.done [#allocation8], 1024
    $region33: #{tpu_custom_call.1} parent=1 // pred_fallthru
      _
    // Predicated region
    $region34: #{tpu_custom_call.1} parent=1 // pred_check
      _
    $region35: #{tpu_custom_call.1} parent=1 // pred_check_branch
      %68 = sbr.rel (0) target = $region37
    $region36: #{tpu_custom_call.1} parent=1 // pred_region
      %70 = dma.done [#allocation8], 1024
    $region37: #{tpu_custom_call.1} parent=1 // pred_fallthru
      _
    %v71 = vld [vmem:[%s0] sm:$0xff]
    %v72 = vld [vmem:[#allocation7] sm:$0xff]
    %v73 = vld [vmem:[#allocation7 + $0x8] sm:$0xff]
    %v74 = vld [vmem:[#allocation7 + $0x10] sm:$0xff]
    %v75 = vld [vmem:[#allocation7 + $0x18] sm:$0xff]
    %v76 = vld [vmem:[#allocation7 + $0x20] sm:$0xff]
    %v77 = vld [vmem:[#allocation7 + $0x28] sm:$0xff]
    %v78 = vld [vmem:[#allocation7 + $0x30] sm:$0xff]
    %v79 = vld [vmem:[#allocation7 + $0x38] sm:$0xff]
    %v80 = vld [vmem:[%s3] sm:$0x1]
    %v81 = vld [vmem:[#allocation9] sm:$0xff]
    %v82 = vld [vmem:[#allocation9 + $0x8] sm:$0xff]
    %v83 = vld [vmem:[#allocation9 + $0x10] sm:$0xff]
    %v84 = vld [vmem:[#allocation9 + $0x18] sm:$0xff]
    %v85 = vld [vmem:[#allocation9 + $0x20] sm:$0xff]
    %v86 = vld [vmem:[#allocation9 + $0x28] sm:$0xff]
    %v87 = vld [vmem:[#allocation9 + $0x30] sm:$0xff]
    %v88 = vld [vmem:[#allocation9 + $0x38] sm:$0xff]
    %v89 = vld [vmem:[%s5] sm:$0x1]
    %v90 = vlaneseq
    %v91 = vand.u32 %v90, 127
    %vm92 = vcmp.ge.s32.totalorder %v91, 64
    %vm93 = vcmp.lt.s32.totalorder %v91, 96
    %vm94 = vmand %vm92, %vm93
    %v95 = vld [vmem:[#allocation4] sm:$0xff]
    %vm96 = vcmask 261120
    %v97 = vsel %vm96, %v95, 0.0
    %v99 = vperm.slane %v80, 0
    %vm101 = vcmask 523264
    %v103 = vsel %vm101, %v97, 0
    %105 = vmatpush.msra.mxu0 0.0
    %106 = vmatpush.msra.mxu0 0.0
    %107 = vmatpush.msra.mxu0 0.0
    %108 = vmatpush.msra.mxu0 0.0
    %109 = vmatpush.msra.mxu0 0.0
    %110 = vmatpush.msra.mxu0 0.0
    %111 = vmatpush.msra.mxu0 0.0
    %112 = vmatpush.msra.mxu0 0.0
    %113 = vmatpush.msra.mxu0 %v79
    %114 = vmatpush.msra.mxu0 %v78
    %115 = vmatpush.msra.mxu0 %v77
    %116 = vmatpush.msra.mxu0 %v76
    %117 = vmatpush.msra.mxu0 %v75
    %118 = vmatpush.msra.mxu0 %v74
    %119 = vmatpush.msra.mxu0 %v73
    %120 = vmatpush.msra.mxu0 %v72
    %121 = vmatmul.f32.gmra.mxu0 %v103
    %v122 = vpop.f32.mrf.mxu0
    %v123 = vadd.f32 %v99, %v122
    %124 = vdwg.mxu0
    %v125 = vtanh.pop %v123
    %v126 = vxor.u32 %v123, 2147483648
    %v127 = vmul.f32 %v126, 1.442695
    %v128 = vpow.pop %v127
    %v129 = vadd.f32 %v128, 1.0
    %v130 = vrcp.pop %v129
    %v131 = vmul.f32 %v129, %v130
    %v132 = vsub.f32 1.0, %v131
    %v133 = vmul.f32 %v130, %v132
    %v134 = vadd.f32 %v130, %v133
    %vm135 = vweird.f32 %v129
    %vm136 = vweird.f32 %v130
    %vm137 = vmor %vm135, %vm136
    %v138 = vsel %vm137, %v130, %v134
    %v139 = vand.u32 2147483647, %v129
    %vm140 = vcmp.eq.f32.partialorder %v139, 8.507059e+37
    %v141 = vand.u32 %v129, 2147483648
    %v142 = vor.u32 1.1754944e-38, %v141
    %v143 = vsel %vm140, %v142, %v138
    %v144 = vmul.f32 1.0, %v143
    %v145 = vsel %vm94, %v125, %v144
    %v146 = vmul.f32 %v145, 0.0
    %148 = vrot.lane.b32.xlu0 %v145, 64
    %v149 = vpop.permute.xlu0 %148
    %v151 = vmul.f32 %v145, %v149
    %153 = vrot.lane.b32.xlu0 %v151, 32
    %v154 = vpop.permute.xlu0 %153
    %v156 = vadd.f32 %v146, %v154
    %v157 = vtanh.pop %v156
    %159 = vrot.lane.b32.xlu0 %v157, 64
    %v160 = vpop.permute.xlu0 %159
    %v162 = vmul.f32 %v145, %v160
    %vm163 = vcmp.gt.s32.totalorder %v71, 0
    %v164 = vsel %vm163, 1, 0
    %165 = vset.pattern.permute.xlu0 0
    %166 = vperm.xlu0 %165, %v164
    %v167 = vpop.permute.xlu0 %166
    %vm168 = vcmp.eq.s32.totalorder %v167, 1
    %v169 = vsel %vm168, %v162, 0.0
    %171 = vrot.lane.b32.xlu0 %v169, 32
    %v172 = vpop.permute.xlu0 %171
    %174 = vst.msk [vmem:[#allocation2] sm:$0xff] %vm96, %v172
    %s175 = scalar_lea.vmem [#allocation4], 48
    %v176 = vld [vmem:[%s175] sm:$0xff]
    %v177 = vsel %vm96, %v176, 0.0
    %v179 = vperm.slane %v89, 0
    %v182 = vsel %vm101, %v177, 0
    %184 = vmatpush.msra.mxu0 0.0
    %185 = vmatpush.msra.mxu0 0.0
    %186 = vmatpush.msra.mxu0 0.0
    %187 = vmatpush.msra.mxu0 0.0
    %188 = vmatpush.msra.mxu0 0.0
    %189 = vmatpush.msra.mxu0 0.0
    %190 = vmatpush.msra.mxu0 0.0
    %191 = vmatpush.msra.mxu0 0.0
    %192 = vmatpush.msra.mxu0 %v88
    %193 = vmatpush.msra.mxu0 %v87
    %194 = vmatpush.msra.mxu0 %v86
    %195 = vmatpush.msra.mxu0 %v85
    %196 = vmatpush.msra.mxu0 %v84
    %197 = vmatpush.msra.mxu0 %v83
    %198 = vmatpush.msra.mxu0 %v82
    %199 = vmatpush.msra.mxu0 %v81
    %200 = vmatmul.f32.gmra.mxu0 %v182
    %v201 = vpop.f32.mrf.mxu0
    %v202 = vadd.f32 %v179, %v201
    %203 = vdwg.mxu0
    %v204 = vtanh.pop %v202
    %v205 = vxor.u32 %v202, 2147483648
    %v206 = vmul.f32 %v205, 1.442695
    %v207 = vpow.pop %v206
    %v208 = vadd.f32 %v207, 1.0
    %v209 = vrcp.pop %v208
    %v210 = vmul.f32 %v208, %v209
    %v211 = vsub.f32 1.0, %v210
    %v212 = vmul.f32 %v209, %v211
    %v213 = vadd.f32 %v209, %v212
    %vm214 = vweird.f32 %v208
    %vm215 = vweird.f32 %v209
    %vm216 = vmor %vm214, %vm215
    %v217 = vsel %vm216, %v209, %v213
    %v218 = vand.u32 2147483647, %v208
    %vm219 = vcmp.eq.f32.partialorder %v218, 8.507059e+37
    %v220 = vand.u32 %v208, 2147483648
    %v221 = vor.u32 1.1754944e-38, %v220
    %v222 = vsel %vm219, %v221, %v217
    %v223 = vmul.f32 1.0, %v222
    %v224 = vsel %vm94, %v204, %v223
    %v225 = vmul.f32 %v224, 0.0
    %227 = vrot.lane.b32.xlu0 %v224, 64
    %v228 = vpop.permute.xlu0 %227
    %v230 = vmul.f32 %v224, %v228
    %232 = vrot.lane.b32.xlu0 %v230, 32
    %v233 = vpop.permute.xlu0 %232
    %v235 = vadd.f32 %v225, %v233
    %v236 = vtanh.pop %v235
    %238 = vrot.lane.b32.xlu0 %v236, 64
    %v239 = vpop.permute.xlu0 %238
    %v241 = vmul.f32 %v224, %v239
    %vm242 = vcmp.gt.s32.totalorder %v71, 6
    %v243 = vsel %vm242, 1, 0
    %244 = vset.pattern.permute.xlu0 0
    %245 = vperm.xlu0 %244, %v243
    %v246 = vpop.permute.xlu0 %245
    %vm247 = vcmp.eq.s32.totalorder %v246, 1
    %v248 = vsel %vm247, %v241, 0.0
    %v249 = vsel %vm247, %v235, 0.0
    %251 = vrot.lane.b32.xlu0 %v248, 32
    %v252 = vpop.permute.xlu0 %251
    %s254 = scalar_lea.vmem [#allocation3], 48
    %255 = vst.msk [vmem:[%s254] sm:$0xff] %vm96, %v252
    %s256 = scalar_lea.vmem [#allocation4], 8
    %v257 = vld [vmem:[%s256] sm:$0xff]
    %259 = vrot.lane.b32.xlu0 %v162, 64
    %v260 = vpop.permute.xlu0 %259
    %v262 = vsel %vm96, %v257, %v260
    %v264 = vsel %vm101, %v262, 0
    %266 = vmatpush.msra.mxu0 0.0
    %267 = vmatpush.msra.mxu0 0.0
    %268 = vmatpush.msra.mxu0 0.0
    %269 = vmatpush.msra.mxu0 0.0
    %270 = vmatpush.msra.mxu0 0.0
    %271 = vmatpush.msra.mxu0 0.0
    %272 = vmatpush.msra.mxu0 0.0
    %273 = vmatpush.msra.mxu0 0.0
    %274 = vmatpush.msra.mxu0 %v79
    %275 = vmatpush.msra.mxu0 %v78
    %276 = vmatpush.msra.mxu0 %v77
    %277 = vmatpush.msra.mxu0 %v76
    %278 = vmatpush.msra.mxu0 %v75
    %279 = vmatpush.msra.mxu0 %v74
    %280 = vmatpush.msra.mxu0 %v73
    %281 = vmatpush.msra.mxu0 %v72
    %282 = vmatmul.f32.gmra.mxu0 %v264
    %v283 = vpop.f32.mrf.mxu0
    %v284 = vadd.f32 %v99, %v283
    %285 = vdwg.mxu0
    %v286 = vtanh.pop %v284
    %v287 = vxor.u32 %v284, 2147483648
    %v288 = vmul.f32 %v287, 1.442695
    %v289 = vpow.pop %v288
    %v290 = vadd.f32 %v289, 1.0
    %v291 = vrcp.pop %v290
    %v292 = vmul.f32 %v290, %v291
    %v293 = vsub.f32 1.0, %v292
    %v294 = vmul.f32 %v291, %v293
    %v295 = vadd.f32 %v291, %v294
    %vm296 = vweird.f32 %v290
    %vm297 = vweird.f32 %v291
    %vm298 = vmor %vm296, %vm297
    %v299 = vsel %vm298, %v291, %v295
    %v300 = vand.u32 2147483647, %v290
    %vm301 = vcmp.eq.f32.partialorder %v300, 8.507059e+37
    %v302 = vand.u32 %v290, 2147483648
    %v303 = vor.u32 1.1754944e-38, %v302
    %v304 = vsel %vm301, %v303, %v299
    %v305 = vmul.f32 1.0, %v304
    %v306 = vsel %vm94, %v286, %v305
    %v307 = vmul.f32 %v306, %v156
    %309 = vrot.lane.b32.xlu0 %v306, 64
    %v310 = vpop.permute.xlu0 %309
    %v312 = vmul.f32 %v306, %v310
    %314 = vrot.lane.b32.xlu0 %v312, 32
    %v315 = vpop.permute.xlu0 %314
    %v317 = vadd.f32 %v307, %v315
    %v318 = vtanh.pop %v317
    %320 = vrot.lane.b32.xlu0 %v318, 64
    %v321 = vpop.permute.xlu0 %320
    %v323 = vmul.f32 %v306, %v321
    %vm324 = vcmp.gt.s32.totalorder %v71, 1
    %v325 = vsel %vm324, 1, 0
    %326 = vset.pattern.permute.xlu0 0
    %327 = vperm.xlu0 %326, %v325
    %v328 = vpop.permute.xlu0 %327
    %vm329 = vcmp.eq.s32.totalorder %v328, 1
    %v330 = vsel %vm329, %v323, 0.0
    %332 = vrot.lane.b32.xlu0 %v330, 32
    %v333 = vpop.permute.xlu0 %332
    %s335 = scalar_lea.vmem [#allocation2], 8
    %336 = vst.msk [vmem:[%s335] sm:$0xff] %vm96, %v333
    %s337 = scalar_lea.vmem [#allocation4], 40
    %v338 = vld [vmem:[%s337] sm:$0xff]
    %339 = vrot.lane.b32.xlu0 %v248, 64
    %v340 = vpop.permute.xlu0 %339
    %v342 = vsel %vm96, %v338, %v340
    %v344 = vsel %vm101, %v342, 0
    %346 = vmatpush.msra.mxu0 0.0
    %347 = vmatpush.msra.mxu0 0.0
    %348 = vmatpush.msra.mxu0 0.0
    %349 = vmatpush.msra.mxu0 0.0
    %350 = vmatpush.msra.mxu0 0.0
    %351 = vmatpush.msra.mxu0 0.0
    %352 = vmatpush.msra.mxu0 0.0
    %353 = vmatpush.msra.mxu0 0.0
    %354 = vmatpush.msra.mxu0 %v88
    %355 = vmatpush.msra.mxu0 %v87
    %356 = vmatpush.msra.mxu0 %v86
    %357 = vmatpush.msra.mxu0 %v85
    %358 = vmatpush.msra.mxu0 %v84
    %359 = vmatpush.msra.mxu0 %v83
    %360 = vmatpush.msra.mxu0 %v82
    %361 = vmatpush.msra.mxu0 %v81
    %362 = vmatmul.f32.gmra.mxu0 %v344
    %v363 = vpop.f32.mrf.mxu0
    %v364 = vadd.f32 %v179, %v363
    %365 = vdwg.mxu0
    %v366 = vtanh.pop %v364
    %v367 = vxor.u32 %v364, 2147483648
    %v368 = vmul.f32 %v367, 1.442695
    %v369 = vpow.pop %v368
    %v370 = vadd.f32 %v369, 1.0
    %v371 = vrcp.pop %v370
    %v372 = vmul.f32 %v370, %v371
    %v373 = vsub.f32 1.0, %v372
    %v374 = vmul.f32 %v371, %v373
    %v375 = vadd.f32 %v371, %v374
    %vm376 = vweird.f32 %v370
    %vm377 = vweird.f32 %v371
    %vm378 = vmor %vm376, %vm377
    %v379 = vsel %vm378, %v371, %v375
    %v380 = vand.u32 2147483647, %v370
    %vm381 = vcmp.eq.f32.partialorder %v380, 8.507059e+37
    %v382 = vand.u32 %v370, 2147483648
    %v383 = vor.u32 1.1754944e-38, %v382
    %v384 = vsel %vm381, %v383, %v379
    %v385 = vmul.f32 1.0, %v384
    %v386 = vsel %vm94, %v366, %v385
    %v387 = vmul.f32 %v386, %v249
    %389 = vrot.lane.b32.xlu0 %v386, 64
    %v390 = vpop.permute.xlu0 %389
    %v392 = vmul.f32 %v386, %v390
    %394 = vrot.lane.b32.xlu0 %v392, 32
    %v395 = vpop.permute.xlu0 %394
    %v397 = vadd.f32 %v387, %v395
    %v398 = vtanh.pop %v397
    %400 = vrot.lane.b32.xlu0 %v398, 64
    %v401 = vpop.permute.xlu0 %400
    %v403 = vmul.f32 %v386, %v401
    %vm404 = vcmp.gt.s32.totalorder %v71, 5
    %v405 = vsel %vm404, 1, 0
    %406 = vset.pattern.permute.xlu0 0
    %407 = vperm.xlu0 %406, %v405
    %v408 = vpop.permute.xlu0 %407
    %vm409 = vcmp.eq.s32.totalorder %v408, 1
    %v410 = vsel %vm409, %v403, %v248
    %v411 = vsel %vm409, %v397, %v249
    %v412 = vsel %vm409, %v403, 0.0
    %414 = vrot.lane.b32.xlu0 %v412, 32
    %v415 = vpop.permute.xlu0 %414
    %s417 = scalar_lea.vmem [#allocation3], 40
    %418 = vst.msk [vmem:[%s417] sm:$0xff] %vm96, %v415
    %s419 = scalar_lea.vmem [#allocation4], 16
    %v420 = vld [vmem:[%s419] sm:$0xff]
    %422 = vrot.lane.b32.xlu0 %v323, 64
    %v423 = vpop.permute.xlu0 %422
    %v425 = vsel %vm96, %v420, %v423
    %v427 = vsel %vm101, %v425, 0
    %429 = vmatpush.msra.mxu0 0.0
    %430 = vmatpush.msra.mxu0 0.0
    %431 = vmatpush.msra.mxu0 0.0
    %432 = vmatpush.msra.mxu0 0.0
    %433 = vmatpush.msra.mxu0 0.0
    %434 = vmatpush.msra.mxu0 0.0
    %435 = vmatpush.msra.mxu0 0.0
    %436 = vmatpush.msra.mxu0 0.0
    %437 = vmatpush.msra.mxu0 %v79
    %438 = vmatpush.msra.mxu0 %v78
    %439 = vmatpush.msra.mxu0 %v77
    %440 = vmatpush.msra.mxu0 %v76
    %441 = vmatpush.msra.mxu0 %v75
    %442 = vmatpush.msra.mxu0 %v74
    %443 = vmatpush.msra.mxu0 %v73
    %444 = vmatpush.msra.mxu0 %v72
    %445 = vmatmul.f32.gmra.mxu0 %v427
    %v446 = vpop.f32.mrf.mxu0
    %v447 = vadd.f32 %v99, %v446
    %448 = vdwg.mxu0
    %v449 = vtanh.pop %v447
    %v450 = vxor.u32 %v447, 2147483648
    %v451 = vmul.f32 %v450, 1.442695
    %v452 = vpow.pop %v451
    %v453 = vadd.f32 %v452, 1.0
    %v454 = vrcp.pop %v453
    %v455 = vmul.f32 %v453, %v454
    %v456 = vsub.f32 1.0, %v455
    %v457 = vmul.f32 %v454, %v456
    %v458 = vadd.f32 %v454, %v457
    %vm459 = vweird.f32 %v453
    %vm460 = vweird.f32 %v454
    %vm461 = vmor %vm459, %vm460
    %v462 = vsel %vm461, %v454, %v458
    %v463 = vand.u32 2147483647, %v453
    %vm464 = vcmp.eq.f32.partialorder %v463, 8.507059e+37
    %v465 = vand.u32 %v453, 2147483648
    %v466 = vor.u32 1.1754944e-38, %v465
    %v467 = vsel %vm464, %v466, %v462
    %v468 = vmul.f32 1.0, %v467
    %v469 = vsel %vm94, %v449, %v468
    %v470 = vmul.f32 %v469, %v317
    %472 = vrot.lane.b32.xlu0 %v469, 64
    %v473 = vpop.permute.xlu0 %472
    %v475 = vmul.f32 %v469, %v473
    %477 = vrot.lane.b32.xlu0 %v475, 32
    %v478 = vpop.permute.xlu0 %477
    %v480 = vadd.f32 %v470, %v478
    %v481 = vtanh.pop %v480
    %483 = vrot.lane.b32.xlu0 %v481, 64
    %v484 = vpop.permute.xlu0 %483
    %v486 = vmul.f32 %v469, %v484
    %vm487 = vcmp.gt.s32.totalorder %v71, 2
    %v488 = vsel %vm487, 1, 0
    %489 = vset.pattern.permute.xlu0 0
    %490 = vperm.xlu0 %489, %v488
    %v491 = vpop.permute.xlu0 %490
    %vm492 = vcmp.eq.s32.totalorder %v491, 1
    %v493 = vsel %vm492, %v486, 0.0
    %495 = vrot.lane.b32.xlu0 %v493, 32
    %v496 = vpop.permute.xlu0 %495
    %s498 = scalar_lea.vmem [#allocation2], 16
    %499 = vst.msk [vmem:[%s498] sm:$0xff] %vm96, %v496
    %s500 = scalar_lea.vmem [#allocation4], 32
    %v501 = vld [vmem:[%s500] sm:$0xff]
    %503 = vrot.lane.b32.xlu0 %v410, 64
    %v504 = vpop.permute.xlu0 %503
    %v506 = vsel %vm96, %v501, %v504
    %v508 = vsel %vm101, %v506, 0
    %510 = vmatpush.msra.mxu0 0.0
    %511 = vmatpush.msra.mxu0 0.0
    %512 = vmatpush.msra.mxu0 0.0
    %513 = vmatpush.msra.mxu0 0.0
    %514 = vmatpush.msra.mxu0 0.0
    %515 = vmatpush.msra.mxu0 0.0
    %516 = vmatpush.msra.mxu0 0.0
    %517 = vmatpush.msra.mxu0 0.0
    %518 = vmatpush.msra.mxu0 %v88
    %519 = vmatpush.msra.mxu0 %v87
    %520 = vmatpush.msra.mxu0 %v86
    %521 = vmatpush.msra.mxu0 %v85
    %522 = vmatpush.msra.mxu0 %v84
    %523 = vmatpush.msra.mxu0 %v83
    %524 = vmatpush.msra.mxu0 %v82
    %525 = vmatpush.msra.mxu0 %v81
    %526 = vmatmul.f32.gmra.mxu0 %v508
    %v527 = vpop.f32.mrf.mxu0
    %v528 = vadd.f32 %v179, %v527
    %529 = vdwg.mxu0
    %v530 = vtanh.pop %v528
    %v531 = vxor.u32 %v528, 2147483648
    %v532 = vmul.f32 %v531, 1.442695
    %v533 = vpow.pop %v532
    %v534 = vadd.f32 %v533, 1.0
    %v535 = vrcp.pop %v534
    %v536 = vmul.f32 %v534, %v535
    %v537 = vsub.f32 1.0, %v536
    %v538 = vmul.f32 %v535, %v537
    %v539 = vadd.f32 %v535, %v538
    %vm540 = vweird.f32 %v534
    %vm541 = vweird.f32 %v535
    %vm542 = vmor %vm540, %vm541
    %v543 = vsel %vm542, %v535, %v539
    %v544 = vand.u32 2147483647, %v534
    %vm545 = vcmp.eq.f32.partialorder %v544, 8.507059e+37
    %v546 = vand.u32 %v534, 2147483648
    %v547 = vor.u32 1.1754944e-38, %v546
    %v548 = vsel %vm545, %v547, %v543
    %v549 = vmul.f32 1.0, %v548
    %v550 = vsel %vm94, %v530, %v549
    %v551 = vmul.f32 %v550, %v411
    %553 = vrot.lane.b32.xlu0 %v550, 64
    %v554 = vpop.permute.xlu0 %553
    %v556 = vmul.f32 %v550, %v554
    %558 = vrot.lane.b32.xlu0 %v556, 32
    %v559 = vpop.permute.xlu0 %558
    %v561 = vadd.f32 %v551, %v559
    %v562 = vtanh.pop %v561
    %564 = vrot.lane.b32.xlu0 %v562, 64
    %v565 = vpop.permute.xlu0 %564
    %v567 = vmul.f32 %v550, %v565
    %vm568 = vcmp.gt.s32.totalorder %v71, 4
    %v569 = vsel %vm568, 1, 0
    %570 = vset.pattern.permute.xlu0 0
    %571 = vperm.xlu0 %570, %v569
    %v572 = vpop.permute.xlu0 %571
    %vm573 = vcmp.eq.s32.totalorder %v572, 1
    %v574 = vsel %vm573, %v567, %v410
    %v575 = vsel %vm573, %v561, %v411
    %v576 = vsel %vm573, %v567, 0.0
    %578 = vrot.lane.b32.xlu0 %v576, 32
    %v579 = vpop.permute.xlu0 %578
    %s581 = scalar_lea.vmem [#allocation3], 32
    %582 = vst.msk [vmem:[%s581] sm:$0xff] %vm96, %v579
    %s583 = scalar_lea.vmem [#allocation4], 24
    %v584 = vld [vmem:[%s583] sm:$0xff]
    %586 = vrot.lane.b32.xlu0 %v486, 64
    %v587 = vpop.permute.xlu0 %586
    %v589 = vsel %vm96, %v584, %v587
    %v591 = vsel %vm101, %v589, 0
    %593 = vmatpush.msra.mxu0 0.0
    %594 = vmatpush.msra.mxu0 0.0
    %595 = vmatpush.msra.mxu0 0.0
    %596 = vmatpush.msra.mxu0 0.0
    %597 = vmatpush.msra.mxu0 0.0
    %598 = vmatpush.msra.mxu0 0.0
    %599 = vmatpush.msra.mxu0 0.0
    %600 = vmatpush.msra.mxu0 0.0
    %601 = vmatpush.msra.mxu0 %v79
    %602 = vmatpush.msra.mxu0 %v78
    %603 = vmatpush.msra.mxu0 %v77
    %604 = vmatpush.msra.mxu0 %v76
    %605 = vmatpush.msra.mxu0 %v75
    %606 = vmatpush.msra.mxu0 %v74
    %607 = vmatpush.msra.mxu0 %v73
    %608 = vmatpush.msra.mxu0 %v72
    %609 = vmatmul.f32.gmra.mxu0 %v591
    %v610 = vpop.f32.mrf.mxu0
    %v611 = vadd.f32 %v99, %v610
    %612 = vdwg.mxu0
    %v613 = vtanh.pop %v611
    %v614 = vxor.u32 %v611, 2147483648
    %v615 = vmul.f32 %v614, 1.442695
    %v616 = vpow.pop %v615
    %v617 = vadd.f32 %v616, 1.0
    %v618 = vrcp.pop %v617
    %v619 = vmul.f32 %v617, %v618
    %v620 = vsub.f32 1.0, %v619
    %v621 = vmul.f32 %v618, %v620
    %v622 = vadd.f32 %v618, %v621
    %vm623 = vweird.f32 %v617
    %vm624 = vweird.f32 %v618
    %vm625 = vmor %vm623, %vm624
    %v626 = vsel %vm625, %v618, %v622
    %v627 = vand.u32 2147483647, %v617
    %vm628 = vcmp.eq.f32.partialorder %v627, 8.507059e+37
    %v629 = vand.u32 %v617, 2147483648
    %v630 = vor.u32 1.1754944e-38, %v629
    %v631 = vsel %vm628, %v630, %v626
    %v632 = vmul.f32 1.0, %v631
    %v633 = vsel %vm94, %v613, %v632
    %v634 = vmul.f32 %v633, %v480
    %636 = vrot.lane.b32.xlu0 %v633, 64
    %v637 = vpop.permute.xlu0 %636
    %v639 = vmul.f32 %v633, %v637
    %641 = vrot.lane.b32.xlu0 %v639, 32
    %v642 = vpop.permute.xlu0 %641
    %v644 = vadd.f32 %v634, %v642
    %v645 = vtanh.pop %v644
    %647 = vrot.lane.b32.xlu0 %v645, 64
    %v648 = vpop.permute.xlu0 %647
    %v650 = vmul.f32 %v633, %v648
    %vm651 = vcmp.gt.s32.totalorder %v71, 3
    %v652 = vsel %vm651, 1, 0
    %653 = vset.pattern.permute.xlu0 0
    %654 = vperm.xlu0 %653, %v652
    %v655 = vpop.permute.xlu0 %654
    %vm656 = vcmp.eq.s32.totalorder %v655, 1
    %v657 = vsel %vm656, %v650, 0.0
    %659 = vrot.lane.b32.xlu0 %v657, 32
    %v660 = vpop.permute.xlu0 %659
    %s662 = scalar_lea.vmem [#allocation2], 24
    %663 = vst.msk [vmem:[%s662] sm:$0xff] %vm96, %v660
    %v664 = vld [vmem:[%s583] sm:$0xff]
    %666 = vrot.lane.b32.xlu0 %v574, 64
    %v667 = vpop.permute.xlu0 %666
    %v669 = vsel %vm96, %v664, %v667
    %v671 = vsel %vm101, %v669, 0
    %673 = vmatpush.msra.mxu0 0.0
    %674 = vmatpush.msra.mxu0 0.0
    %675 = vmatpush.msra.mxu0 0.0
    %676 = vmatpush.msra.mxu0 0.0
    %677 = vmatpush.msra.mxu0 0.0
    %678 = vmatpush.msra.mxu0 0.0
    %679 = vmatpush.msra.mxu0 0.0
    %680 = vmatpush.msra.mxu0 0.0
    %681 = vmatpush.msra.mxu0 %v88
    %682 = vmatpush.msra.mxu0 %v87
    %683 = vmatpush.msra.mxu0 %v86
    %684 = vmatpush.msra.mxu0 %v85
    %685 = vmatpush.msra.mxu0 %v84
    %686 = vmatpush.msra.mxu0 %v83
    %687 = vmatpush.msra.mxu0 %v82
    %688 = vmatpush.msra.mxu0 %v81
    %689 = vmatmul.f32.gmra.mxu0 %v671
    %v690 = vpop.f32.mrf.mxu0
    %v691 = vadd.f32 %v179, %v690
    %692 = vdwg.mxu0
    %v693 = vtanh.pop %v691
    %v694 = vxor.u32 %v691, 2147483648
    %v695 = vmul.f32 %v694, 1.442695
    %v696 = vpow.pop %v695
    %v697 = vadd.f32 %v696, 1.0
    %v698 = vrcp.pop %v697
    %v699 = vmul.f32 %v697, %v698
    %v700 = vsub.f32 1.0, %v699
    %v701 = vmul.f32 %v698, %v700
    %v702 = vadd.f32 %v698, %v701
    %vm703 = vweird.f32 %v697
    %vm704 = vweird.f32 %v698
    %vm705 = vmor %vm703, %vm704
    %v706 = vsel %vm705, %v698, %v702
    %v707 = vand.u32 2147483647, %v697
    %vm708 = vcmp.eq.f32.partialorder %v707, 8.507059e+37
    %v709 = vand.u32 %v697, 2147483648
    %v710 = vor.u32 1.1754944e-38, %v709
    %v711 = vsel %vm708, %v710, %v706
    %v712 = vmul.f32 1.0, %v711
    %v713 = vsel %vm94, %v693, %v712
    %v714 = vmul.f32 %v713, %v575
    %716 = vrot.lane.b32.xlu0 %v713, 64
    %v717 = vpop.permute.xlu0 %716
    %v719 = vmul.f32 %v713, %v717
    %721 = vrot.lane.b32.xlu0 %v719, 32
    %v722 = vpop.permute.xlu0 %721
    %v724 = vadd.f32 %v714, %v722
    %v725 = vtanh.pop %v724
    %727 = vrot.lane.b32.xlu0 %v725, 64
    %v728 = vpop.permute.xlu0 %727
    %v730 = vmul.f32 %v713, %v728
    %v731 = vsel %vm656, %v730, %v574
    %v732 = vsel %vm656, %v724, %v575
    %v733 = vsel %vm656, %v730, 0.0
    %735 = vrot.lane.b32.xlu0 %v733, 32
    %v736 = vpop.permute.xlu0 %735
    %s738 = scalar_lea.vmem [#allocation3], 24
    %739 = vst.msk [vmem:[%s738] sm:$0xff] %vm96, %v736
    %v740 = vld [vmem:[%s500] sm:$0xff]
    %742 = vrot.lane.b32.xlu0 %v650, 64
    %v743 = vpop.permute.xlu0 %742
    %v745 = vsel %vm96, %v740, %v743
    %v747 = vsel %vm101, %v745, 0
    %749 = vmatpush.msra.mxu0 0.0
    %750 = vmatpush.msra.mxu0 0.0
    %751 = vmatpush.msra.mxu0 0.0
    %752 = vmatpush.msra.mxu0 0.0
    %753 = vmatpush.msra.mxu0 0.0
    %754 = vmatpush.msra.mxu0 0.0
    %755 = vmatpush.msra.mxu0 0.0
    %756 = vmatpush.msra.mxu0 0.0
    %757 = vmatpush.msra.mxu0 %v79
    %758 = vmatpush.msra.mxu0 %v78
    %759 = vmatpush.msra.mxu0 %v77
    %760 = vmatpush.msra.mxu0 %v76
    %761 = vmatpush.msra.mxu0 %v75
    %762 = vmatpush.msra.mxu0 %v74
    %763 = vmatpush.msra.mxu0 %v73
    %764 = vmatpush.msra.mxu0 %v72
    %765 = vmatmul.f32.gmra.mxu0 %v747
    %v766 = vpop.f32.mrf.mxu0
    %v767 = vadd.f32 %v99, %v766
    %768 = vdwg.mxu0
    %v769 = vtanh.pop %v767
    %v770 = vxor.u32 %v767, 2147483648
    %v771 = vmul.f32 %v770, 1.442695
    %v772 = vpow.pop %v771
    %v773 = vadd.f32 %v772, 1.0
    %v774 = vrcp.pop %v773
    %v775 = vmul.f32 %v773, %v774
    %v776 = vsub.f32 1.0, %v775
    %v777 = vmul.f32 %v774, %v776
    %v778 = vadd.f32 %v774, %v777
    %vm779 = vweird.f32 %v773
    %vm780 = vweird.f32 %v774
    %vm781 = vmor %vm779, %vm780
    %v782 = vsel %vm781, %v774, %v778
    %v783 = vand.u32 2147483647, %v773
    %vm784 = vcmp.eq.f32.partialorder %v783, 8.507059e+37
    %v785 = vand.u32 %v773, 2147483648
    %v786 = vor.u32 1.1754944e-38, %v785
    %v787 = vsel %vm784, %v786, %v782
    %v788 = vmul.f32 1.0, %v787
    %v789 = vsel %vm94, %v769, %v788
    %v790 = vmul.f32 %v789, %v644
    %792 = vrot.lane.b32.xlu0 %v789, 64
    %v793 = vpop.permute.xlu0 %792
    %v795 = vmul.f32 %v789, %v793
    %797 = vrot.lane.b32.xlu0 %v795, 32
    %v798 = vpop.permute.xlu0 %797
    %v800 = vadd.f32 %v790, %v798
    %v801 = vtanh.pop %v800
    %803 = vrot.lane.b32.xlu0 %v801, 64
    %v804 = vpop.permute.xlu0 %803
    %v806 = vmul.f32 %v789, %v804
    %v807 = vsel %vm573, %v806, 0.0
    %809 = vrot.lane.b32.xlu0 %v807, 32
    %v810 = vpop.permute.xlu0 %809
    %s812 = scalar_lea.vmem [#allocation2], 32
    %813 = vst.msk [vmem:[%s812] sm:$0xff] %vm96, %v810
    %v814 = vld [vmem:[%s419] sm:$0xff]
    %816 = vrot.lane.b32.xlu0 %v731, 64
    %v817 = vpop.permute.xlu0 %816
    %v819 = vsel %vm96, %v814, %v817
    %v821 = vsel %vm101, %v819, 0
    %823 = vmatpush.msra.mxu0 0.0
    %824 = vmatpush.msra.mxu0 0.0
    %825 = vmatpush.msra.mxu0 0.0
    %826 = vmatpush.msra.mxu0 0.0
    %827 = vmatpush.msra.mxu0 0.0
    %828 = vmatpush.msra.mxu0 0.0
    %829 = vmatpush.msra.mxu0 0.0
    %830 = vmatpush.msra.mxu0 0.0
    %831 = vmatpush.msra.mxu0 %v88
    %832 = vmatpush.msra.mxu0 %v87
    %833 = vmatpush.msra.mxu0 %v86
    %834 = vmatpush.msra.mxu0 %v85
    %835 = vmatpush.msra.mxu0 %v84
    %836 = vmatpush.msra.mxu0 %v83
    %837 = vmatpush.msra.mxu0 %v82
    %838 = vmatpush.msra.mxu0 %v81
    %839 = vmatmul.f32.gmra.mxu0 %v821
    %v840 = vpop.f32.mrf.mxu0
    %v841 = vadd.f32 %v179, %v840
    %842 = vdwg.mxu0
    %v843 = vtanh.pop %v841
    %v844 = vxor.u32 %v841, 2147483648
    %v845 = vmul.f32 %v844, 1.442695
    %v846 = vpow.pop %v845
    %v847 = vadd.f32 %v846, 1.0
    %v848 = vrcp.pop %v847
    %v849 = vmul.f32 %v847, %v848
    %v850 = vsub.f32 1.0, %v849
    %v851 = vmul.f32 %v848, %v850
    %v852 = vadd.f32 %v848, %v851
    %vm853 = vweird.f32 %v847
    %vm854 = vweird.f32 %v848
    %vm855 = vmor %vm853, %vm854
    %v856 = vsel %vm855, %v848, %v852
    %v857 = vand.u32 2147483647, %v847
    %vm858 = vcmp.eq.f32.partialorder %v857, 8.507059e+37
    %v859 = vand.u32 %v847, 2147483648
    %v860 = vor.u32 1.1754944e-38, %v859
    %v861 = vsel %vm858, %v860, %v856
    %v862 = vmul.f32 1.0, %v861
    %v863 = vsel %vm94, %v843, %v862
    %v864 = vmul.f32 %v863, %v732
    %866 = vrot.lane.b32.xlu0 %v863, 64
    %v867 = vpop.permute.xlu0 %866
    %v869 = vmul.f32 %v863, %v867
    %871 = vrot.lane.b32.xlu0 %v869, 32
    %v872 = vpop.permute.xlu0 %871
    %v874 = vadd.f32 %v864, %v872
    %v875 = vtanh.pop %v874
    %877 = vrot.lane.b32.xlu0 %v875, 64
    %v878 = vpop.permute.xlu0 %877
    %v880 = vmul.f32 %v863, %v878
    %v881 = vsel %vm492, %v880, %v731
    %v882 = vsel %vm492, %v874, %v732
    %v883 = vsel %vm492, %v880, 0.0
    %885 = vrot.lane.b32.xlu0 %v883, 32
    %v886 = vpop.permute.xlu0 %885
    %s888 = scalar_lea.vmem [#allocation3], 16
    %889 = vst.msk [vmem:[%s888] sm:$0xff] %vm96, %v886
    %v890 = vld [vmem:[%s337] sm:$0xff]
    %892 = vrot.lane.b32.xlu0 %v806, 64
    %v893 = vpop.permute.xlu0 %892
    %v895 = vsel %vm96, %v890, %v893
    %v897 = vsel %vm101, %v895, 0
    %899 = vmatpush.msra.mxu0 0.0
    %900 = vmatpush.msra.mxu0 0.0
    %901 = vmatpush.msra.mxu0 0.0
    %902 = vmatpush.msra.mxu0 0.0
    %903 = vmatpush.msra.mxu0 0.0
    %904 = vmatpush.msra.mxu0 0.0
    %905 = vmatpush.msra.mxu0 0.0
    %906 = vmatpush.msra.mxu0 0.0
    %907 = vmatpush.msra.mxu0 %v79
    %908 = vmatpush.msra.mxu0 %v78
    %909 = vmatpush.msra.mxu0 %v77
    %910 = vmatpush.msra.mxu0 %v76
    %911 = vmatpush.msra.mxu0 %v75
    %912 = vmatpush.msra.mxu0 %v74
    %913 = vmatpush.msra.mxu0 %v73
    %914 = vmatpush.msra.mxu0 %v72
    %915 = vmatmul.f32.gmra.mxu0 %v897
    %v916 = vpop.f32.mrf.mxu0
    %v917 = vadd.f32 %v99, %v916
    %918 = vdwg.mxu0
    %v919 = vtanh.pop %v917
    %v920 = vxor.u32 %v917, 2147483648
    %v921 = vmul.f32 %v920, 1.442695
    %v922 = vpow.pop %v921
    %v923 = vadd.f32 %v922, 1.0
    %v924 = vrcp.pop %v923
    %v925 = vmul.f32 %v923, %v924
    %v926 = vsub.f32 1.0, %v925
    %v927 = vmul.f32 %v924, %v926
    %v928 = vadd.f32 %v924, %v927
    %vm929 = vweird.f32 %v923
    %vm930 = vweird.f32 %v924
    %vm931 = vmor %vm929, %vm930
    %v932 = vsel %vm931, %v924, %v928
    %v933 = vand.u32 2147483647, %v923
    %vm934 = vcmp.eq.f32.partialorder %v933, 8.507059e+37
    %v935 = vand.u32 %v923, 2147483648
    %v936 = vor.u32 1.1754944e-38, %v935
    %v937 = vsel %vm934, %v936, %v932
    %v938 = vmul.f32 1.0, %v937
    %v939 = vsel %vm94, %v919, %v938
    %v940 = vmul.f32 %v939, %v800
    %942 = vrot.lane.b32.xlu0 %v939, 64
    %v943 = vpop.permute.xlu0 %942
    %v945 = vmul.f32 %v939, %v943
    %947 = vrot.lane.b32.xlu0 %v945, 32
    %v948 = vpop.permute.xlu0 %947
    %v950 = vadd.f32 %v940, %v948
    %v951 = vtanh.pop %v950
    %953 = vrot.lane.b32.xlu0 %v951, 64
    %v954 = vpop.permute.xlu0 %953
    %v956 = vmul.f32 %v939, %v954
    %v957 = vsel %vm409, %v956, 0.0
    %959 = vrot.lane.b32.xlu0 %v957, 32
    %v960 = vpop.permute.xlu0 %959
    %s962 = scalar_lea.vmem [#allocation2], 40
    %963 = vst.msk [vmem:[%s962] sm:$0xff] %vm96, %v960
    %v964 = vld [vmem:[%s256] sm:$0xff]
    %966 = vrot.lane.b32.xlu0 %v881, 64
    %v967 = vpop.permute.xlu0 %966
    %v969 = vsel %vm96, %v964, %v967
    %v971 = vsel %vm101, %v969, 0
    %973 = vmatpush.msra.mxu0 0.0
    %974 = vmatpush.msra.mxu0 0.0
    %975 = vmatpush.msra.mxu0 0.0
    %976 = vmatpush.msra.mxu0 0.0
    %977 = vmatpush.msra.mxu0 0.0
    %978 = vmatpush.msra.mxu0 0.0
    %979 = vmatpush.msra.mxu0 0.0
    %980 = vmatpush.msra.mxu0 0.0
    %981 = vmatpush.msra.mxu0 %v88
    %982 = vmatpush.msra.mxu0 %v87
    %983 = vmatpush.msra.mxu0 %v86
    %984 = vmatpush.msra.mxu0 %v85
    %985 = vmatpush.msra.mxu0 %v84
    %986 = vmatpush.msra.mxu0 %v83
    %987 = vmatpush.msra.mxu0 %v82
    %988 = vmatpush.msra.mxu0 %v81
    %989 = vmatmul.f32.gmra.mxu0 %v971
    %v990 = vpop.f32.mrf.mxu0
    %v991 = vadd.f32 %v179, %v990
    %992 = vdwg.mxu0
    %v993 = vtanh.pop %v991
    %v994 = vxor.u32 %v991, 2147483648
    %v995 = vmul.f32 %v994, 1.442695
    %v996 = vpow.pop %v995
    %v997 = vadd.f32 %v996, 1.0
    %v998 = vrcp.pop %v997
    %v999 = vmul.f32 %v997, %v998
    %v1000 = vsub.f32 1.0, %v999
    %v1001 = vmul.f32 %v998, %v1000
    %v1002 = vadd.f32 %v998, %v1001
    %vm1003 = vweird.f32 %v997
    %vm1004 = vweird.f32 %v998
    %vm1005 = vmor %vm1003, %vm1004
    %v1006 = vsel %vm1005, %v998, %v1002
    %v1007 = vand.u32 2147483647, %v997
    %vm1008 = vcmp.eq.f32.partialorder %v1007, 8.507059e+37
    %v1009 = vand.u32 %v997, 2147483648
    %v1010 = vor.u32 1.1754944e-38, %v1009
    %v1011 = vsel %vm1008, %v1010, %v1006
    %v1012 = vmul.f32 1.0, %v1011
    %v1013 = vsel %vm94, %v993, %v1012
    %v1014 = vmul.f32 %v1013, %v882
    %1016 = vrot.lane.b32.xlu0 %v1013, 64
    %v1017 = vpop.permute.xlu0 %1016
    %v1019 = vmul.f32 %v1013, %v1017
    %1021 = vrot.lane.b32.xlu0 %v1019, 32
    %v1022 = vpop.permute.xlu0 %1021
    %v1024 = vadd.f32 %v1014, %v1022
    %v1025 = vtanh.pop %v1024
    %1027 = vrot.lane.b32.xlu0 %v1025, 64
    %v1028 = vpop.permute.xlu0 %1027
    %v1030 = vmul.f32 %v1013, %v1028
    %v1031 = vsel %vm329, %v1030, %v881
    %v1032 = vsel %vm329, %v1024, %v882
    %v1033 = vsel %vm329, %v1030, 0.0
    %1035 = vrot.lane.b32.xlu0 %v1033, 32
    %v1036 = vpop.permute.xlu0 %1035
    %s1038 = scalar_lea.vmem [#allocation3], 8
    %1039 = vst.msk [vmem:[%s1038] sm:$0xff] %vm96, %v1036
    %v1040 = vld [vmem:[%s175] sm:$0xff]
    %1042 = vrot.lane.b32.xlu0 %v956, 64
    %v1043 = vpop.permute.xlu0 %1042
    %v1045 = vsel %vm96, %v1040, %v1043
    %v1047 = vsel %vm101, %v1045, 0
    %1049 = vmatpush.msra.mxu0 0.0
    %1050 = vmatpush.msra.mxu0 0.0
    %1051 = vmatpush.msra.mxu0 0.0
    %1052 = vmatpush.msra.mxu0 0.0
    %1053 = vmatpush.msra.mxu0 0.0
    %1054 = vmatpush.msra.mxu0 0.0
    %1055 = vmatpush.msra.mxu0 0.0
    %1056 = vmatpush.msra.mxu0 0.0
    %1057 = vmatpush.msra.mxu0 %v79
    %1058 = vmatpush.msra.mxu0 %v78
    %1059 = vmatpush.msra.mxu0 %v77
    %1060 = vmatpush.msra.mxu0 %v76
    %1061 = vmatpush.msra.mxu0 %v75
    %1062 = vmatpush.msra.mxu0 %v74
    %1063 = vmatpush.msra.mxu0 %v73
    %1064 = vmatpush.msra.mxu0 %v72
    %1065 = vmatmul.f32.gmra.mxu0 %v1047
    %v1066 = vpop.f32.mrf.mxu0
    %v1067 = vadd.f32 %v99, %v1066
    %1068 = vdwg.mxu0
    %v1069 = vtanh.pop %v1067
    %v1070 = vxor.u32 %v1067, 2147483648
    %v1071 = vmul.f32 %v1070, 1.442695
    %v1072 = vpow.pop %v1071
    %v1073 = vadd.f32 %v1072, 1.0
    %v1074 = vrcp.pop %v1073
    %v1075 = vmul.f32 %v1073, %v1074
    %v1076 = vsub.f32 1.0, %v1075
    %v1077 = vmul.f32 %v1074, %v1076
    %v1078 = vadd.f32 %v1074, %v1077
    %vm1079 = vweird.f32 %v1073
    %vm1080 = vweird.f32 %v1074
    %vm1081 = vmor %vm1079, %vm1080
    %v1082 = vsel %vm1081, %v1074, %v1078
    %v1083 = vand.u32 2147483647, %v1073
    %vm1084 = vcmp.eq.f32.partialorder %v1083, 8.507059e+37
    %v1085 = vand.u32 %v1073, 2147483648
    %v1086 = vor.u32 1.1754944e-38, %v1085
    %v1087 = vsel %vm1084, %v1086, %v1082
    %v1088 = vmul.f32 1.0, %v1087
    %v1089 = vsel %vm94, %v1069, %v1088
    %v1090 = vmul.f32 %v1089, %v950
    %1092 = vrot.lane.b32.xlu0 %v1089, 64
    %v1093 = vpop.permute.xlu0 %1092
    %v1095 = vmul.f32 %v1089, %v1093
    %1097 = vrot.lane.b32.xlu0 %v1095, 32
    %v1098 = vpop.permute.xlu0 %1097
    %v1100 = vadd.f32 %v1090, %v1098
    %v1101 = vtanh.pop %v1100
    %1103 = vrot.lane.b32.xlu0 %v1101, 64
    %v1104 = vpop.permute.xlu0 %1103
    %v1106 = vmul.f32 %v1089, %v1104
    %v1107 = vsel %vm247, %v1106, 0.0
    %1109 = vrot.lane.b32.xlu0 %v1107, 32
    %v1110 = vpop.permute.xlu0 %1109
    %s1112 = scalar_lea.vmem [#allocation2], 48
    %1113 = vst.msk [vmem:[%s1112] sm:$0xff] %vm96, %v1110
    %v1114 = vld [vmem:[#allocation4] sm:$0xff]
    %1116 = vrot.lane.b32.xlu0 %v1031, 64
    %v1117 = vpop.permute.xlu0 %1116
    %v1119 = vsel %vm96, %v1114, %v1117
    %v1121 = vsel %vm101, %v1119, 0
    %1123 = vmatpush.msra.mxu0 0.0
    %1124 = vmatpush.msra.mxu0 0.0
    %1125 = vmatpush.msra.mxu0 0.0
    %1126 = vmatpush.msra.mxu0 0.0
    %1127 = vmatpush.msra.mxu0 0.0
    %1128 = vmatpush.msra.mxu0 0.0
    %1129 = vmatpush.msra.mxu0 0.0
    %1130 = vmatpush.msra.mxu0 0.0
    %1131 = vmatpush.msra.mxu0 %v88
    %1132 = vmatpush.msra.mxu0 %v87
    %1133 = vmatpush.msra.mxu0 %v86
    %1134 = vmatpush.msra.mxu0 %v85
    %1135 = vmatpush.msra.mxu0 %v84
    %1136 = vmatpush.msra.mxu0 %v83
    %1137 = vmatpush.msra.mxu0 %v82
    %1138 = vmatpush.msra.mxu0 %v81
    %1139 = vmatmul.f32.gmra.mxu0 %v1121
    %v1140 = vpop.f32.mrf.mxu0
    %v1141 = vadd.f32 %v179, %v1140
    %1142 = vdwg.mxu0
    %v1143 = vtanh.pop %v1141
    %v1144 = vxor.u32 %v1141, 2147483648
    %v1145 = vmul.f32 %v1144, 1.442695
    %v1146 = vpow.pop %v1145
    %v1147 = vadd.f32 %v1146, 1.0
    %v1148 = vrcp.pop %v1147
    %v1149 = vmul.f32 %v1147, %v1148
    %v1150 = vsub.f32 1.0, %v1149
    %v1151 = vmul.f32 %v1148, %v1150
    %v1152 = vadd.f32 %v1148, %v1151
    %vm1153 = vweird.f32 %v1147
    %vm1154 = vweird.f32 %v1148
    %vm1155 = vmor %vm1153, %vm1154
    %v1156 = vsel %vm1155, %v1148, %v1152
    %v1157 = vand.u32 2147483647, %v1147
    %vm1158 = vcmp.eq.f32.partialorder %v1157, 8.507059e+37
    %v1159 = vand.u32 %v1147, 2147483648
    %v1160 = vor.u32 1.1754944e-38, %v1159
    %v1161 = vsel %vm1158, %v1160, %v1156
    %v1162 = vmul.f32 1.0, %v1161
    %v1163 = vsel %vm94, %v1143, %v1162
    %v1164 = vmul.f32 %v1163, %v1032
    %1166 = vrot.lane.b32.xlu0 %v1163, 64
    %v1167 = vpop.permute.xlu0 %1166
    %v1169 = vmul.f32 %v1163, %v1167
    %1171 = vrot.lane.b32.xlu0 %v1169, 32
    %v1172 = vpop.permute.xlu0 %1171
    %v1174 = vadd.f32 %v1164, %v1172
    %v1175 = vtanh.pop %v1174
    %1177 = vrot.lane.b32.xlu0 %v1175, 64
    %v1178 = vpop.permute.xlu0 %1177
    %v1180 = vmul.f32 %v1163, %v1178
    %v1181 = vsel %vm168, %v1180, 0.0
    %1183 = vrot.lane.b32.xlu0 %v1181, 32
    %v1184 = vpop.permute.xlu0 %1183
    %1186 = vst.msk [vmem:[#allocation3] sm:$0xff] %vm96, %v1184
    %v1187 = vld [vmem:[#allocation2] sm:$0xff]
    %v1188 = vld [vmem:[#allocation2 + $0x8] sm:$0xff]
    %v1189 = vld [vmem:[#allocation2 + $0x10] sm:$0xff]
    %v1190 = vld [vmem:[#allocation2 + $0x18] sm:$0xff]
    %v1191 = vld [vmem:[#allocation2 + $0x20] sm:$0xff]
    %v1192 = vld [vmem:[#allocation2 + $0x28] sm:$0xff]
    %v1193 = vld [vmem:[#allocation2 + $0x30] sm:$0xff]
    %1194 = vst.msk [vmem:[#allocation10] sm:$0xff] %vm96, %v1187
    %1195 = vst.msk [vmem:[#allocation10 + $0x8] sm:$0xff] %vm96, %v1188
    %1196 = vst.msk [vmem:[#allocation10 + $0x10] sm:$0xff] %vm96, %v1189
    %1197 = vst.msk [vmem:[#allocation10 + $0x18] sm:$0xff] %vm96, %v1190
    %1198 = vst.msk [vmem:[#allocation10 + $0x20] sm:$0xff] %vm96, %v1191
    %1199 = vst.msk [vmem:[#allocation10 + $0x28] sm:$0xff] %vm96, %v1192
    %1200 = vst.msk [vmem:[#allocation10 + $0x30] sm:$0xff] %vm96, %v1193
    %v1201 = vld [vmem:[#allocation3] sm:$0xff]
    %v1202 = vld [vmem:[#allocation3 + $0x8] sm:$0xff]
    %v1203 = vld [vmem:[#allocation3 + $0x10] sm:$0xff]
    %v1204 = vld [vmem:[#allocation3 + $0x18] sm:$0xff]
    %v1205 = vld [vmem:[#allocation3 + $0x20] sm:$0xff]
    %v1206 = vld [vmem:[#allocation3 + $0x28] sm:$0xff]
    %v1207 = vld [vmem:[#allocation3 + $0x30] sm:$0xff]
    %1215 = vrot.lane.b32.xlu0 %v1201, 32
    %v1216 = vpop.permute.xlu0 %1215
    %1217 = vrot.lane.b32.xlu0 %v1202, 32
    %v1218 = vpop.permute.xlu0 %1217
    %1219 = vrot.lane.b32.xlu0 %v1203, 32
    %v1220 = vpop.permute.xlu0 %1219
    %1221 = vrot.lane.b32.xlu0 %v1204, 32
    %v1222 = vpop.permute.xlu0 %1221
    %1223 = vrot.lane.b32.xlu0 %v1205, 32
    %v1224 = vpop.permute.xlu0 %1223
    %1225 = vrot.lane.b32.xlu0 %v1206, 32
    %v1226 = vpop.permute.xlu0 %1225
    %1227 = vrot.lane.b32.xlu0 %v1207, 32
    %v1228 = vpop.permute.xlu0 %1227
    %vm1236 = vcmask 523520
    %1237 = vst.msk [vmem:[#allocation10] sm:$0xff] %vm1236, %v1216
    %1238 = vst.msk [vmem:[#allocation10 + $0x8] sm:$0xff] %vm1236, %v1218
    %1239 = vst.msk [vmem:[#allocation10 + $0x10] sm:$0xff] %vm1236, %v1220
    %1240 = vst.msk [vmem:[#allocation10 + $0x18] sm:$0xff] %vm1236, %v1222
    %1241 = vst.msk [vmem:[#allocation10 + $0x20] sm:$0xff] %vm1236, %v1224
    %1242 = vst.msk [vmem:[#allocation10 + $0x28] sm:$0xff] %vm1236, %v1226
    %1243 = vst.msk [vmem:[#allocation10 + $0x30] sm:$0xff] %vm1236, %v1228
    // Predicated region
    $region38: #{tpu_custom_call.1} parent=1 // pred_check
      _
    $region39: #{tpu_custom_call.1} parent=1 // pred_check_branch
      %1245 = sbr.rel (0) target = $region41
    $region40: #{tpu_custom_call.1} parent=1 // pred_region
      %1247 = vsyncadd [#allocation6], 0
      %s1248 = sshll.u32 [#allocation10], 4
      %s1249 = int_to_ptr.vmem [resolvable:$true] %s1248
      %s1250 = sshll.u32 %s6, 4
      %s1251 = int_to_ptr.hbm [resolvable:$true] %s1250
      %1256 = dma.vmem_to_hbm [thread:$0]  %s1249, 896, %s1251, [#allocation6], 128, 128, 8
    $region41: #{tpu_custom_call.1} parent=1 // pred_fallthru
      _
    // Predicated region
    $region42: #{tpu_custom_call.1} parent=1 // pred_check
      _
    $region43: #{tpu_custom_call.1} parent=1 // pred_check_branch
      %1258 = sbr.rel (0) target = $region45
    $region44: #{tpu_custom_call.1} parent=1 // pred_region
      %1260 = dma.done [#allocation6], 896
    $region45: #{tpu_custom_call.1} parent=1 // pred_fallthru
      _
    %1261 = vsyncpa [#allocation5], 1
    %1262 = vsyncpa [#allocation8], 1
    %1263 = vsyncpa [#allocation6], 1

</llo_original>
